<compile_context>
chip_gen: v7x
topology: tpu7x:2x2x1
jax: 0.10.0
libtpu: 0.0.40
codegen_flags: <defaults>
</compile_context>

<pallas_src>
import functools

import jax
import jax.numpy as jnp
from jax import lax
from jax.experimental import pallas as pl
from jax.experimental.pallas import tpu as pltpu

EPS = 1e-5  # nn.BatchNorm2d default


def _conv_stats_kernel(x_ref, w1_ref, w2_ref, conv_ref, stats_ref, *,
                       stride, H, W, Hout, Wout, C_in, C_out):
    # x_ref    : (1, C_in, H*W)        bf16, lane-dense NCHW-contiguous image
    # w1_ref   : (3, C_in, C_out)      bf16, (1,3)-conv taps
    # w2_ref   : (3, C_out, C_out)     bf16, (3,1)-conv taps
    # conv_ref : (1, C_out, Hout*Wout) f32, lane-dense NCHW-contiguous result
    # stats_ref: (1, 2, C_out)         f32, per-tile [mean, M2] for BatchNorm

    # ReLU on the full-128-lane view (relu(0)=0, so zero conv padding commutes).
    x = jnp.maximum(x_ref[0], 0)                             # (C_in, H*W) bf16

    # One small in-kernel transpose to channels-last for the matmuls (replaces
    # a full-HBM wrapper transpose).
    xt = x.T.reshape(H, W, C_in)                             # (H, W, C_in)
    zw = jnp.zeros((H, 1, C_in), xt.dtype)
    xp = jnp.concatenate([zw, xt, zw], axis=1)               # pad W: (H, W+2, C_in)

    # ---- Conv (1,3), stride (1,s), pad (0,1): 3 per-tap MXU matmuls ---------
    mid = jnp.zeros((H * Wout, C_out), jnp.float32)
    for kw in range(3):
        tap = lax.slice(xp, (0, kw, 0),
                        (H, kw + stride * (Wout - 1) + 1, C_in),
                        (1, stride, 1))                      # (H, Wout, C_in)
        mid = mid + jnp.dot(tap.reshape(H * Wout, C_in), w1_ref[kw],
                            preferred_element_type=jnp.float32)

    # bf16 intermediate for the second MXU pass (f32 accumulation kept).
    midb = mid.astype(jnp.bfloat16).reshape(H, Wout, C_out)
    zh = jnp.zeros((1, Wout, C_out), midb.dtype)
    midp = jnp.concatenate([zh, midb, zh], axis=0)           # pad H: (H+2, Wout, C_out)

    # ---- Conv (3,1), stride (s,1), pad (1,0): 3 per-tap MXU matmuls ---------
    y = jnp.zeros((Hout * Wout, C_out), jnp.float32)
    for kh in range(3):
        tap = lax.slice(midp, (kh, 0, 0),
                        (kh + stride * (Hout - 1) + 1, Wout, C_out),
                        (stride, 1, 1))                      # (Hout, Wout, C_out)
        y = y + jnp.dot(tap.reshape(Hout * Wout, C_out), w2_ref[kh],
                        preferred_element_type=jnp.float32)

    # ---- per-tile BatchNorm statistics from the f32 result ------------------
    # Shifted sums: (tile mean, tile M2) instead of (sum, sum_sq) to avoid
    # E[x^2]-E[x]^2 cancellation.
    inv_cnt = jnp.float32(1.0 / (Hout * Wout))
    mu = jnp.sum(y, axis=0, keepdims=True) * inv_cnt         # (1, C_out)
    d = y - mu
    m2 = jnp.sum(d * d, axis=0, keepdims=True)               # (1, C_out)
    stats_ref[...] = jnp.concatenate([mu, m2], axis=0)[None]

    # Lane-dense, NCHW-contiguous store (unmasked 128-wide vst).
    conv_ref[...] = y.T[None]                                # (1, C_out, Hout*Wout)


def _bn_apply_kernel(conv_ref, scale_ref, shift_ref, y_ref):
    # conv_ref/y_ref: (1, C_out, S) -- lane-dense, NCHW-contiguous (aliased)
    # scale/shift   : (C_out, 1)    -- per-channel, broadcast along lanes
    y_ref[...] = conv_ref[...] * scale_ref[...] + shift_ref[...]


@functools.partial(jax.jit, static_argnames=("stride",))
def conv313(x_nchw, w1, w2, gamma, beta, stride=1):
    """x_nchw: (N,C_in,H,W); w1: (C_out,C_in,1,3); w2: (C_out,C_out,3,1).

    gamma/beta: per-channel affine (use ones/zeros for affine=False).
    """
    N, C_in, H, W = x_nchw.shape
    C_out = w1.shape[0]
    Wout = (W + 2 - 3) // stride + 1
    Hout = (H + 2 - 3) // stride + 1
    S_in, S_out = H * W, Hout * Wout

    # NCHW is already the layout we want (channels-first, spatial on the lane
    # axis): free metadata reshape, bf16 cast halves the pass-1 DMA bytes.
    xb = x_nchw.reshape(N, C_in, S_in).astype(jnp.bfloat16)

    # torch OIHW weights -> (tap, in, out) so each tap is one (C_in, C_out) matmul.
    w1k = jnp.transpose(w1[:, :, 0, :], (2, 1, 0)).astype(jnp.bfloat16)  # (3, C_in, C_out)
    w2k = jnp.transpose(w2[:, :, :, 0], (2, 1, 0)).astype(jnp.bfloat16)  # (3, C_out, C_out)

    # Tiles here are KB-scale; default scoped-VMEM limits are ample on
    # v5e/v6e/v7x.  TODO(synk): re-budget + row-tile before production H/W.
    cparams = pltpu.CompilerParams(dimension_semantics=("parallel",))

    kernel1 = functools.partial(
        _conv_stats_kernel, stride=stride, H=H, W=W, Hout=Hout, Wout=Wout,
        C_in=C_in, C_out=C_out)

    # ---- pass 1: relu + conv1 + conv2 + partial BN stats, tiled over batch ---
    conv, stats = pl.pallas_call(
        kernel1,
        out_shape=(jax.ShapeDtypeStruct((N, C_out, S_out), jnp.float32),
                   jax.ShapeDtypeStruct((N, 2, C_out), jnp.float32)),
        grid=(N,),
        in_specs=[
            pl.BlockSpec((1, C_in, S_in), lambda n: (n, 0, 0)),
            pl.BlockSpec((3, C_in, C_out), lambda n: (0, 0, 0)),
            pl.BlockSpec((3, C_out, C_out), lambda n: (0, 0, 0)),
        ],
        out_specs=(
            pl.BlockSpec((1, C_out, S_out), lambda n: (n, 0, 0)),
            pl.BlockSpec((1, 2, C_out), lambda n: (n, 0, 0)),
        ),
        compiler_params=cparams,
    )(xb, w1k, w2k)

    # ---- tiny per-channel pooled merge -> precomputed scale/shift ------------
    mean_b = stats[:, 0, :]                                   # (N, C_out)
    m2_b = stats[:, 1, :]                                     # (N, C_out)
    tile_cnt = jnp.float32(S_out)
    total_cnt = jnp.float32(N * S_out)
    mean = jnp.mean(mean_b, axis=0)
    m2 = jnp.sum(m2_b, axis=0) + tile_cnt * jnp.sum((mean_b - mean) ** 2, axis=0)
    var = m2 / total_cnt         # biased var = torch train-mode normalization
                                 # (torch's running_var would use m2/(total_cnt-1))
    scale = gamma.astype(jnp.float32) * lax.rsqrt(var + EPS)
    shift = beta.astype(jnp.float32) - mean * scale
    scale2 = scale.reshape(C_out, 1)
    shift2 = shift.reshape(C_out, 1)

    # ---- pass 2: y = conv*scale + shift, lane-dense, written over conv buffer
    y = pl.pallas_call(
        _bn_apply_kernel,
        out_shape=jax.ShapeDtypeStruct((N, C_out, S_out), jnp.float32),
        grid=(N,),
        in_specs=[
            pl.BlockSpec((1, C_out, S_out), lambda n: (n, 0, 0)),
            pl.BlockSpec((C_out, 1), lambda n: (0, 0)),
            pl.BlockSpec((C_out, 1), lambda n: (0, 0)),
        ],
        out_specs=pl.BlockSpec((1, C_out, S_out), lambda n: (n, 0, 0)),
        input_output_aliases={0: 0},
        compiler_params=cparams,
    )(conv, scale2, shift2)

    return y.reshape(N, C_out, Hout, Wout)                    # free: already NCHW


def _reference(x, w1, w2, gamma, beta, stride):
    # Replicates the kernel's bf16 rounding of inputs/weights/mid so the
    # comparison isolates kernel bugs rather than bf16 quantization.
    f32 = jnp.float32
    xb = x.astype(jnp.bfloat16).astype(f32)
    w1b = w1.astype(jnp.bfloat16).astype(f32)
    w2b = w2.astype(jnp.bfloat16).astype(f32)
    r = jnp.maximum(xb, 0.0)
    y1 = lax.conv_general_dilated(r, w1b, window_strides=(1, stride),
                                  padding=((0, 0), (1, 1)),
                                  dimension_numbers=("NCHW", "OIHW", "NCHW"))
    y1 = y1.astype(jnp.bfloat16).astype(f32)
    y2 = lax.conv_general_dilated(y1, w2b, window_strides=(stride, 1),
                                  padding=((1, 1), (0, 0)),
                                  dimension_numbers=("NCHW", "OIHW", "NCHW"))
    mean = jnp.mean(y2, axis=(0, 2, 3), keepdims=True)
    var = jnp.mean((y2 - mean) ** 2, axis=(0, 2, 3), keepdims=True)
    yn = (y2 - mean) * lax.rsqrt(var + EPS)
    return yn * gamma.reshape(1, -1, 1, 1) + beta.reshape(1, -1, 1, 1)


if __name__ == "__main__":
    N, C_in, C_out, H, W, stride = 2, 4, 8, 16, 16, 1

    key = jax.random.PRNGKey(0)
    kx, k1, k2 = jax.random.split(key, 3)
    x = jax.random.normal(kx, (N, C_in, H, W), jnp.float32)
    w1 = 0.1 * jax.random.normal(k1, (C_out, C_in, 1, 3), jnp.float32)
    w2 = 0.1 * jax.random.normal(k2, (C_out, C_out, 3, 1), jnp.float32)
    # BatchNorm2d init: gamma=1, beta=0 (identical to affine=False)
    gamma = jnp.ones((C_out,), jnp.float32)
    beta = jnp.zeros((C_out,), jnp.float32)

    out = jax.block_until_ready(conv313(x, w1, w2, gamma, beta, stride=stride))
    ref = jax.block_until_ready(_reference(x, w1, w2, gamma, beta, stride))

    assert out.shape == ref.shape, (out.shape, ref.shape)
    max_err = float(jnp.max(jnp.abs(out - ref)))
    assert jnp.allclose(out, ref, atol=5e-3, rtol=5e-3), max_err

    print("KERNEL_OK")
</pallas_src>

<mosaic_0001>
module attributes {stable_mosaic.version = 11 : i64} {
  func.func @_conv_stats_kernel(%arg0: i32, %arg1: memref<1x4x256xbf16, #tpu.memory_space<vmem>>, %arg2: memref<3x4x8xbf16, #tpu.memory_space<vmem>>, %arg3: memref<3x8x8xbf16, #tpu.memory_space<vmem>>, %arg4: memref<1x8x256xf32, #tpu.memory_space<vmem>>, %arg5: memref<1x2x8xf32, #tpu.memory_space<vmem>>) attributes {dimension_semantics = [#tpu.dimension_semantics<parallel>], iteration_bounds = array<i64: 2>, scalar_prefetch = 0 : i64, scratch_operands = 0 : i64, tpu.core_type = #tpu.core_type<tc>, window_params = [{transform_indices = @transform_0, window_bounds = array<i64: 1, 4, 256>}, {pipeline_mode = #tpu.pipeline_mode<synchronous>, transform_indices = @transform_1, window_bounds = array<i64: 3, 4, 8>}, {pipeline_mode = #tpu.pipeline_mode<synchronous>, transform_indices = @transform_2, window_bounds = array<i64: 3, 8, 8>}, {transform_indices = @transform_3, window_bounds = array<i64: 1, 8, 256>}, {transform_indices = @transform_4, window_bounds = array<i64: 1, 2, 8>}]} {
    %c0 = arith.constant 0 : index
    %c0_0 = arith.constant 0 : index
    %c0_1 = arith.constant 0 : index
    %0 = vector.load %arg1[%c0, %c0_0, %c0_1] : memref<1x4x256xbf16, #tpu.memory_space<vmem>>, vector<1x4x256xbf16>
    %1 = vector.shape_cast %0 : vector<1x4x256xbf16> to vector<4x256xbf16>
    %cst = arith.constant 0.000000e+00 : bf16
    %2 = vector.broadcast %cst : bf16 to vector<4x256xbf16>
    %3 = arith.maximumf %1, %2 : vector<4x256xbf16>
    %4 = tpu.transpose %3, [1, 0] : vector<4x256xbf16> -> vector<256x4xbf16>
    %5 = vector.shape_cast %4 : vector<256x4xbf16> to vector<16x16x4xbf16>
    %cst_2 = arith.constant 0.000000e+00 : bf16
    %6 = vector.broadcast %cst_2 : bf16 to vector<16x1x4xbf16>
    %7 = tpu.concatenate %6, %5, %6 in 1 : vector<16x1x4xbf16>, vector<16x16x4xbf16>, vector<16x1x4xbf16> -> vector<16x18x4xbf16>
    %cst_3 = arith.constant 0.000000e+00 : f32
    %8 = vector.broadcast %cst_3 : f32 to vector<256x8xf32>
    %9 = vector.extract_strided_slice %7 {offsets = [0, 0, 0], sizes = [16, 16, 4], strides = [1, 1, 1]} : vector<16x18x4xbf16> to vector<16x16x4xbf16>
    %10 = vector.shape_cast %9 : vector<16x16x4xbf16> to vector<256x4xbf16>
    %c0_4 = arith.constant 0 : index
    %c0_5 = arith.constant 0 : index
    %c0_6 = arith.constant 0 : index
    %11 = vector.load %arg2[%c0_4, %c0_5, %c0_6] : memref<3x4x8xbf16, #tpu.memory_space<vmem>>, vector<1x4x8xbf16>
    %12 = vector.shape_cast %11 : vector<1x4x8xbf16> to vector<4x8xbf16>
    %cst_7 = arith.constant dense<0.000000e+00> : vector<256x8xf32>
    %13 = tpu.matmul %10, %12, %cst_7 {dimension_numbers = #tpu.dot_dimension_numbers<[1], [0], [0], [1], [0, 0, 1, 1], [], []>} : vector<256x4xbf16>, vector<4x8xbf16>, vector<256x8xf32> -> vector<256x8xf32>
    %14 = arith.addf %8, %13 : vector<256x8xf32>
    %15 = vector.extract_strided_slice %7 {offsets = [0, 1, 0], sizes = [16, 16, 4], strides = [1, 1, 1]} : vector<16x18x4xbf16> to vector<16x16x4xbf16>
    %16 = vector.shape_cast %15 : vector<16x16x4xbf16> to vector<256x4xbf16>
    %c1 = arith.constant 1 : index
    %c0_8 = arith.constant 0 : index
    %c0_9 = arith.constant 0 : index
    %17 = vector.load %arg2[%c1, %c0_8, %c0_9] : memref<3x4x8xbf16, #tpu.memory_space<vmem>>, vector<1x4x8xbf16>
    %18 = vector.shape_cast %17 : vector<1x4x8xbf16> to vector<4x8xbf16>
    %cst_10 = arith.constant dense<0.000000e+00> : vector<256x8xf32>
    %19 = tpu.matmul %16, %18, %cst_10 {dimension_numbers = #tpu.dot_dimension_numbers<[1], [0], [0], [1], [0, 0, 1, 1], [], []>} : vector<256x4xbf16>, vector<4x8xbf16>, vector<256x8xf32> -> vector<256x8xf32>
    %20 = arith.addf %14, %19 : vector<256x8xf32>
    %21 = vector.extract_strided_slice %7 {offsets = [0, 2, 0], sizes = [16, 16, 4], strides = [1, 1, 1]} : vector<16x18x4xbf16> to vector<16x16x4xbf16>
    %22 = vector.shape_cast %21 : vector<16x16x4xbf16> to vector<256x4xbf16>
    %c2 = arith.constant 2 : index
    %c0_11 = arith.constant 0 : index
    %c0_12 = arith.constant 0 : index
    %23 = vector.load %arg2[%c2, %c0_11, %c0_12] : memref<3x4x8xbf16, #tpu.memory_space<vmem>>, vector<1x4x8xbf16>
    %24 = vector.shape_cast %23 : vector<1x4x8xbf16> to vector<4x8xbf16>
    %cst_13 = arith.constant dense<0.000000e+00> : vector<256x8xf32>
    %25 = tpu.matmul %22, %24, %cst_13 {dimension_numbers = #tpu.dot_dimension_numbers<[1], [0], [0], [1], [0, 0, 1, 1], [], []>} : vector<256x4xbf16>, vector<4x8xbf16>, vector<256x8xf32> -> vector<256x8xf32>
    %26 = arith.addf %20, %25 : vector<256x8xf32>
    %27 = arith.truncf %26 : vector<256x8xf32> to vector<256x8xbf16>
    %28 = vector.shape_cast %27 : vector<256x8xbf16> to vector<16x16x8xbf16>
    %cst_14 = arith.constant 0.000000e+00 : bf16
    %29 = vector.broadcast %cst_14 : bf16 to vector<1x16x8xbf16>
    %30 = tpu.concatenate %29, %28, %29 in 0 : vector<1x16x8xbf16>, vector<16x16x8xbf16>, vector<1x16x8xbf16> -> vector<18x16x8xbf16>
    %cst_15 = arith.constant 0.000000e+00 : f32
    %31 = vector.broadcast %cst_15 : f32 to vector<256x8xf32>
    %32 = vector.extract_strided_slice %30 {offsets = [0, 0, 0], sizes = [16, 16, 8], strides = [1, 1, 1]} : vector<18x16x8xbf16> to vector<16x16x8xbf16>
    %33 = vector.shape_cast %32 : vector<16x16x8xbf16> to vector<256x8xbf16>
    %c0_16 = arith.constant 0 : index
    %c0_17 = arith.constant 0 : index
    %c0_18 = arith.constant 0 : index
    %34 = vector.load %arg3[%c0_16, %c0_17, %c0_18] : memref<3x8x8xbf16, #tpu.memory_space<vmem>>, vector<1x8x8xbf16>
    %35 = vector.shape_cast %34 : vector<1x8x8xbf16> to vector<8x8xbf16>
    %cst_19 = arith.constant dense<0.000000e+00> : vector<256x8xf32>
    %36 = tpu.matmul %33, %35, %cst_19 {dimension_numbers = #tpu.dot_dimension_numbers<[1], [0], [0], [1], [0, 0, 1, 1], [], []>} : vector<256x8xbf16>, vector<8x8xbf16>, vector<256x8xf32> -> vector<256x8xf32>
    %37 = arith.addf %31, %36 : vector<256x8xf32>
    %38 = vector.extract_strided_slice %30 {offsets = [1, 0, 0], sizes = [16, 16, 8], strides = [1, 1, 1]} : vector<18x16x8xbf16> to vector<16x16x8xbf16>
    %39 = vector.shape_cast %38 : vector<16x16x8xbf16> to vector<256x8xbf16>
    %c1_20 = arith.constant 1 : index
    %c0_21 = arith.constant 0 : index
    %c0_22 = arith.constant 0 : index
    %40 = vector.load %arg3[%c1_20, %c0_21, %c0_22] : memref<3x8x8xbf16, #tpu.memory_space<vmem>>, vector<1x8x8xbf16>
    %41 = vector.shape_cast %40 : vector<1x8x8xbf16> to vector<8x8xbf16>
    %cst_23 = arith.constant dense<0.000000e+00> : vector<256x8xf32>
    %42 = tpu.matmul %39, %41, %cst_23 {dimension_numbers = #tpu.dot_dimension_numbers<[1], [0], [0], [1], [0, 0, 1, 1], [], []>} : vector<256x8xbf16>, vector<8x8xbf16>, vector<256x8xf32> -> vector<256x8xf32>
    %43 = arith.addf %37, %42 : vector<256x8xf32>
    %44 = vector.extract_strided_slice %30 {offsets = [2, 0, 0], sizes = [16, 16, 8], strides = [1, 1, 1]} : vector<18x16x8xbf16> to vector<16x16x8xbf16>
    %45 = vector.shape_cast %44 : vector<16x16x8xbf16> to vector<256x8xbf16>
    %c2_24 = arith.constant 2 : index
    %c0_25 = arith.constant 0 : index
    %c0_26 = arith.constant 0 : index
    %46 = vector.load %arg3[%c2_24, %c0_25, %c0_26] : memref<3x8x8xbf16, #tpu.memory_space<vmem>>, vector<1x8x8xbf16>
    %47 = vector.shape_cast %46 : vector<1x8x8xbf16> to vector<8x8xbf16>
    %cst_27 = arith.constant dense<0.000000e+00> : vector<256x8xf32>
    %48 = tpu.matmul %45, %47, %cst_27 {dimension_numbers = #tpu.dot_dimension_numbers<[1], [0], [0], [1], [0, 0, 1, 1], [], []>} : vector<256x8xbf16>, vector<8x8xbf16>, vector<256x8xf32> -> vector<256x8xf32>
    %49 = arith.addf %43, %48 : vector<256x8xf32>
    %cst_28 = arith.constant dense<0.000000e+00> : vector<8xf32>
    %50 = vector.multi_reduction <add>, %49, %cst_28 [0] : vector<256x8xf32> to vector<8xf32>
    %51 = vector.shape_cast %50 : vector<8xf32> to vector<1x8xf32>
    %cst_29 = arith.constant 3.906250e-03 : f32
    %52 = vector.broadcast %cst_29 : f32 to vector<1x8xf32>
    %53 = arith.mulf %51, %52 : vector<1x8xf32>
    %54 = vector.broadcast %53 : vector<1x8xf32> to vector<256x8xf32>
    %55 = arith.subf %49, %54 : vector<256x8xf32>
    %56 = arith.mulf %55, %55 : vector<256x8xf32>
    %cst_30 = arith.constant dense<0.000000e+00> : vector<8xf32>
    %57 = vector.multi_reduction <add>, %56, %cst_30 [0] : vector<256x8xf32> to vector<8xf32>
    %58 = vector.shape_cast %57 : vector<8xf32> to vector<1x8xf32>
    %59 = tpu.concatenate %53, %58 in 0 : vector<1x8xf32>, vector<1x8xf32> -> vector<2x8xf32>
    %60 = vector.shape_cast %59 : vector<2x8xf32> to vector<1x2x8xf32>
    %c0_31 = arith.constant 0 : index
    %c0_32 = arith.constant 0 : index
    %c0_33 = arith.constant 0 : index
    %61 = vector.load %arg5[%c0_31, %c0_32, %c0_33] : memref<1x2x8xf32, #tpu.memory_space<vmem>>, vector<1x2x8xf32>
    tpu.vector_store %arg5[%c0_31, %c0_32, %c0_33], %60 {strides = array<i32>} : memref<1x2x8xf32, #tpu.memory_space<vmem>>, vector<1x2x8xf32>,
    %62 = tpu.transpose %49, [1, 0] : vector<256x8xf32> -> vector<8x256xf32>
    %63 = vector.shape_cast %62 : vector<8x256xf32> to vector<1x8x256xf32>
    %c0_34 = arith.constant 0 : index
    %c0_35 = arith.constant 0 : index
    %c0_36 = arith.constant 0 : index
    %64 = vector.load %arg4[%c0_34, %c0_35, %c0_36] : memref<1x8x256xf32, #tpu.memory_space<vmem>>, vector<1x8x256xf32>
    tpu.vector_store %arg4[%c0_34, %c0_35, %c0_36], %63 {strides = array<i32>} : memref<1x8x256xf32, #tpu.memory_space<vmem>>, vector<1x8x256xf32>,
    return
  }
  func.func @transform_0(%arg0: i32) -> (i32, i32, i32) {
    %c0_i32 = arith.constant 0 : i32
    %c0_i32_0 = arith.constant 0 : i32
    %c0_i32_1 = arith.constant 0 : i32
    return %arg0, %c0_i32, %c0_i32_0 : i32, i32, i32
  }
  func.func @transform_1(%arg0: i32) -> (i32, i32, i32) {
    %c0_i32 = arith.constant 0 : i32
    %c0_i32_0 = arith.constant 0 : i32
    %c0_i32_1 = arith.constant 0 : i32
    %c0_i32_2 = arith.constant 0 : i32
    return %c0_i32, %c0_i32_0, %c0_i32_1 : i32, i32, i32
  }
  func.func @transform_2(%arg0: i32) -> (i32, i32, i32) {
    %c0_i32 = arith.constant 0 : i32
    %c0_i32_0 = arith.constant 0 : i32
    %c0_i32_1 = arith.constant 0 : i32
    %c0_i32_2 = arith.constant 0 : i32
    return %c0_i32, %c0_i32_0, %c0_i32_1 : i32, i32, i32
  }
  func.func @transform_3(%arg0: i32) -> (i32, i32, i32) {
    %c0_i32 = arith.constant 0 : i32
    %c0_i32_0 = arith.constant 0 : i32
    %c0_i32_1 = arith.constant 0 : i32
    return %arg0, %c0_i32, %c0_i32_0 : i32, i32, i32
  }
  func.func @transform_4(%arg0: i32) -> (i32, i32, i32) {
    %c0_i32 = arith.constant 0 : i32
    %c0_i32_0 = arith.constant 0 : i32
    %c0_i32_1 = arith.constant 0 : i32
    return %arg0, %c0_i32, %c0_i32_0 : i32, i32, i32
  }
}

module attributes {stable_mosaic.version = 11 : i64} {
  func.func @_bn_apply_kernel(%arg0: i32, %arg1: memref<1x8x256xf32, #tpu.memory_space<vmem>>, %arg2: memref<8x1xf32, #tpu.memory_space<vmem>>, %arg3: memref<8x1xf32, #tpu.memory_space<vmem>>, %arg4: memref<1x8x256xf32, #tpu.memory_space<vmem>>) attributes {dimension_semantics = [#tpu.dimension_semantics<parallel>], iteration_bounds = array<i64: 2>, scalar_prefetch = 0 : i64, scratch_operands = 0 : i64, tpu.core_type = #tpu.core_type<tc>, window_params = [{transform_indices = @transform_0, window_bounds = array<i64: 1, 8, 256>}, {pipeline_mode = #tpu.pipeline_mode<synchronous>, transform_indices = @transform_1, window_bounds = array<i64: 8, 1>}, {pipeline_mode = #tpu.pipeline_mode<synchronous>, transform_indices = @transform_2, window_bounds = array<i64: 8, 1>}, {transform_indices = @transform_3, window_bounds = array<i64: 1, 8, 256>}]} {
    %c0 = arith.constant 0 : index
    %c0_0 = arith.constant 0 : index
    %c0_1 = arith.constant 0 : index
    %0 = vector.load %arg1[%c0, %c0_0, %c0_1] : memref<1x8x256xf32, #tpu.memory_space<vmem>>, vector<1x8x256xf32>
    %c0_2 = arith.constant 0 : index
    %c0_3 = arith.constant 0 : index
    %1 = vector.load %arg2[%c0_2, %c0_3] : memref<8x1xf32, #tpu.memory_space<vmem>>, vector<8x1xf32>
    %2 = vector.shape_cast %1 : vector<8x1xf32> to vector<1x8x1xf32>
    %3 = vector.broadcast %2 : vector<1x8x1xf32> to vector<1x8x256xf32>
    %4 = arith.mulf %0, %3 : vector<1x8x256xf32>
    %c0_4 = arith.constant 0 : index
    %c0_5 = arith.constant 0 : index
    %5 = vector.load %arg3[%c0_4, %c0_5] : memref<8x1xf32, #tpu.memory_space<vmem>>, vector<8x1xf32>
    %6 = vector.shape_cast %5 : vector<8x1xf32> to vector<1x8x1xf32>
    %7 = vector.broadcast %6 : vector<1x8x1xf32> to vector<1x8x256xf32>
    %8 = arith.addf %4, %7 : vector<1x8x256xf32>
    %c0_6 = arith.constant 0 : index
    %c0_7 = arith.constant 0 : index
    %c0_8 = arith.constant 0 : index
    %9 = vector.load %arg4[%c0_6, %c0_7, %c0_8] : memref<1x8x256xf32, #tpu.memory_space<vmem>>, vector<1x8x256xf32>
    tpu.vector_store %arg4[%c0_6, %c0_7, %c0_8], %8 {strides = array<i32>} : memref<1x8x256xf32, #tpu.memory_space<vmem>>, vector<1x8x256xf32>,
    return
  }
  func.func @transform_0(%arg0: i32) -> (i32, i32, i32) {
    %c0_i32 = arith.constant 0 : i32
    %c0_i32_0 = arith.constant 0 : i32
    %c0_i32_1 = arith.constant 0 : i32
    return %arg0, %c0_i32, %c0_i32_0 : i32, i32, i32
  }
  func.func @transform_1(%arg0: i32) -> (i32, i32) {
    %c0_i32 = arith.constant 0 : i32
    %c0_i32_0 = arith.constant 0 : i32
    %c0_i32_1 = arith.constant 0 : i32
    return %c0_i32, %c0_i32_0 : i32, i32
  }
  func.func @transform_2(%arg0: i32) -> (i32, i32) {
    %c0_i32 = arith.constant 0 : i32
    %c0_i32_0 = arith.constant 0 : i32
    %c0_i32_1 = arith.constant 0 : i32
    return %c0_i32, %c0_i32_0 : i32, i32
  }
  func.func @transform_3(%arg0: i32) -> (i32, i32, i32) {
    %c0_i32 = arith.constant 0 : i32
    %c0_i32_0 = arith.constant 0 : i32
    %c0_i32_1 = arith.constant 0 : i32
    return %arg0, %c0_i32, %c0_i32_0 : i32, i32, i32
  }
}

</mosaic_0001>

<llo_original>
// kernel: conv313.3
$region0: #{conv313.3}
  #allocation0 [shape = 'u32[]', space=smem, size = 0x4, offset = 0x4, fixed_abs, tag = 'smem constant byte address 0x4 - core index']
  #allocation1 [shape = 'u32[144,128]{1,0:T(1,128)}', space=vmem, size = 0x12000, scoped, tag = 'internal scratch']
  %s0 = inlined_call_operand.vmem [shape: f32[2,8,256], index: 0, kind: input, shape index: {}, may-alias: {0,3}]
  %s1 = inlined_call_operand.vmem [shape: f32[8,1], index: 1, kind: input, shape index: {}]
  %s2 = inlined_call_operand.vmem [shape: f32[8,1], index: 2, kind: input, shape index: {}]
  %s3 = inlined_call_operand.vmem [shape: f32[2,8,256], index: 3, kind: output, shape index: {}, may-alias: {0,3}]
  %s4 = sld [smem:[#allocation0]]
  $region45: #{conv313.3} parent=0
    _
  %s6 = ssub.s32 1, %s4
  %s7 = scalar_select 0, %s6, %s4
  loop: start=0, step=1, limit=4
  $region2: #{conv313.3} parent=0 // loop_pre_header
    _
  $region3: #{conv313.3} parent=0 // loop_header
    %s9 = sphi 0, %s13
    %p10 = scmp.ge.s32.totalorder %s9, 4
    %s19 = sphi 0, %s21
    %s22 = sphi 0, %s19
    %s23 = sphi 0, %s22
    %s39 = sphi 0, %s23
    %s43 = sphi 0, %s43
    %s45 = sphi 0, %s43
    %s46 = sphi 0, %s45
    %s60 = sphi 0, %s46
    %s64 = sphi 0, %s64
    %s66 = sphi 0, %s64
    %s67 = sphi 0, %s66
    %s81 = sphi 0, %s67
    %s87 = sphi 0, %s89
    %s90 = sphi 0, %s87
    %s91 = sphi 0, %s90
    %s107 = sphi 0, %s91
  $region4: #{conv313.3} parent=0 // loop_header_branch
    %12 = sbr.rel (%p10) target = $region8
  $region5: #{conv313.3} parent=0 // loop_body
    %s14 = ssub.s32 %s9, 1
    %s15 = ssub.s32 %s9, 2
    %s16 = sadd.s32 %s9, 1
    %s17 = ssub.s32 %s9, %s16
    %p18 = scmp.eq.s32.totalorder %s17, 0
    %s20 = sadd.s32 %s19, 1
    %s21 = scalar_select %p18, %s19, %s20
    %p24 = pneg %p18
    %p25 = scmp.eq.s32.totalorder %s9, 1
    %p26 = por %p24, %p25
    %p27 = scmp.ne.s32.totalorder %s19, %s22
    %p28 = scmp.eq.s32.totalorder %s9, 0
    %p29 = por %p27, %p28
    %p30 = scmp.ne.s32.totalorder %s19, %s22
    %p31 = scmp.eq.s32.totalorder %s14, 1
    %p32 = por %p30, %p31
    %p33 = scmp.ne.s32.totalorder %s22, %s23
    %p34 = scmp.eq.s32.totalorder %s14, 0
    %p35 = por %p33, %p34
    %p36 = scmp.ne.s32.totalorder %s22, %s23
    %p37 = scmp.eq.s32.totalorder %s15, 1
    %p38 = por %p36, %p37
    %p40 = scmp.ne.s32.totalorder %s23, %s39
    %p41 = scmp.eq.s32.totalorder %s15, 0
    %p42 = por %p40, %p41
    %s44 = sadd.s32 %s43, 1
    %p47 = scmp.eq.s32.totalorder %s9, 1
    %p48 = scmp.ne.s32.totalorder %s43, %s45
    %p49 = scmp.eq.s32.totalorder %s9, 0
    %p50 = por %p48, %p49
    %p51 = scmp.ne.s32.totalorder %s43, %s45
    %p52 = scmp.eq.s32.totalorder %s14, 1
    %p53 = por %p51, %p52
    %p54 = scmp.ne.s32.totalorder %s45, %s46
    %p55 = scmp.eq.s32.totalorder %s14, 0
    %p56 = por %p54, %p55
    %p57 = scmp.ne.s32.totalorder %s45, %s46
    %p58 = scmp.eq.s32.totalorder %s15, 1
    %p59 = por %p57, %p58
    %p61 = scmp.ne.s32.totalorder %s46, %s60
    %p62 = scmp.eq.s32.totalorder %s15, 0
    %p63 = por %p61, %p62
    %s65 = sadd.s32 %s64, 1
    %p68 = scmp.eq.s32.totalorder %s9, 1
    %p69 = scmp.ne.s32.totalorder %s64, %s66
    %p70 = scmp.eq.s32.totalorder %s9, 0
    %p71 = por %p69, %p70
    %p72 = scmp.ne.s32.totalorder %s64, %s66
    %p73 = scmp.eq.s32.totalorder %s14, 1
    %p74 = por %p72, %p73
    %p75 = scmp.ne.s32.totalorder %s66, %s67
    %p76 = scmp.eq.s32.totalorder %s14, 0
    %p77 = por %p75, %p76
    %p78 = scmp.ne.s32.totalorder %s66, %s67
    %p79 = scmp.eq.s32.totalorder %s15, 1
    %p80 = por %p78, %p79
    %p82 = scmp.ne.s32.totalorder %s67, %s81
    %p83 = scmp.eq.s32.totalorder %s15, 0
    %p84 = por %p82, %p83
    %s85 = ssub.s32 %s9, %s16
    %p86 = scmp.eq.s32.totalorder %s85, 0
    %s88 = sadd.s32 %s87, 1
    %s89 = scalar_select %p86, %s87, %s88
    %p92 = pneg %p86
    %p93 = scmp.eq.s32.totalorder %s9, 1
    %p94 = por %p92, %p93
    %p95 = scmp.ne.s32.totalorder %s87, %s90
    %p96 = scmp.eq.s32.totalorder %s9, 0
    %p97 = por %p95, %p96
    %p98 = scmp.ne.s32.totalorder %s87, %s90
    %p99 = scmp.eq.s32.totalorder %s14, 1
    %p100 = por %p98, %p99
    %p101 = scmp.ne.s32.totalorder %s90, %s91
    %p102 = scmp.eq.s32.totalorder %s14, 0
    %p103 = por %p101, %p102
    %p104 = scmp.ne.s32.totalorder %s90, %s91
    %p105 = scmp.eq.s32.totalorder %s15, 1
    %p106 = por %p104, %p105
    %p108 = scmp.ne.s32.totalorder %s91, %s107
    %p109 = scmp.eq.s32.totalorder %s15, 0
    %p110 = por %p108, %p109
    %p111 = scmp.le.s32.totalorder 1, %s9
    %p112 = scmp.lt.s32.totalorder %s9, 3
    %p113 = pnand %p111, %p112
    %p114 = pneg %p113
    // Predicated region
    $region9: #{conv313.3} parent=5 // pred_check
      _
    $region10: #{conv313.3} parent=5 // pred_check_branch
      %116 = sbr.rel (%p113) target = $region12
    $region11: #{conv313.3} parent=5 // pred_region
      %s117 = ssub.s32 %s9, 1
      // Predicated region
      $region13: #{conv313.3} parent=11 // pred_check
        %p118 = pneg %p56
      $region14: #{conv313.3} parent=11 // pred_check_branch
        %120 = sbr.rel (%p118) target = $region16
      $region15: #{conv313.3} parent=11 // pred_region
        _
      $region16: #{conv313.3} parent=11 // pred_fallthru
        _
      // Predicated region
      $region17: #{conv313.3} parent=11 // pred_check
        %p121 = pneg %p77
      $region18: #{conv313.3} parent=11 // pred_check_branch
        %123 = sbr.rel (%p121) target = $region20
      $region19: #{conv313.3} parent=11 // pred_region
        _
      $region20: #{conv313.3} parent=11 // pred_fallthru
        _
    $region12: #{conv313.3} parent=5 // pred_fallthru
      _
    %p124 = scmp.lt.s32.totalorder %s9, 2
    // Predicated region
    $region21: #{conv313.3} parent=5 // pred_check
      %p125 = pneg %p124
    $region22: #{conv313.3} parent=5 // pred_check_branch
      %127 = sbr.rel (%p125) target = $region24
    $region23: #{conv313.3} parent=5 // pred_region
      // Predicated region
      $region25: #{conv313.3} parent=23 // pred_check
        %p128 = pneg %p29
      $region26: #{conv313.3} parent=23 // pred_check_branch
        %130 = sbr.rel (%p128) target = $region28
      $region27: #{conv313.3} parent=23 // pred_region
        %p131 = scmp.lt.s32.totalorder %s9, 1
        %s132 = scalar_select %p131, %s9, 1
        %s133 = smul.addr %s132, 2
        %s134 = smul.addr %s133, 8
        %s135 = scalar_lea.vmem %s0, %s134
      $region28: #{conv313.3} parent=23 // pred_fallthru
        _
    $region24: #{conv313.3} parent=5 // pred_fallthru
      _
    %p136 = scmp.le.s32.totalorder 1, %s9
    %p137 = scmp.lt.s32.totalorder %s9, 3
    %p138 = pnand %p136, %p137
    %p139 = pneg %p138
    // Predicated region
    $region29: #{conv313.3} parent=5 // pred_check
      _
    $region30: #{conv313.3} parent=5 // pred_check_branch
      %141 = sbr.rel (%p138) target = $region32
    $region31: #{conv313.3} parent=5 // pred_region
      %s142 = ssub.s32 %s9, 1
      %p143 = scmp.lt.s32.totalorder %s14, 1
      %s144 = scalar_select %p143, %s14, 1
      %s145 = smul.addr %s144, 2
      %s146 = smul.addr %s145, 8
      %s147 = scalar_lea.vmem %s0, %s146
      %p148 = pneg %p35
      %p149 = pneg %p32
      %p150 = pneg %p56
      %p151 = pneg %p53
      %p152 = pneg %p77
      %p153 = pneg %p74
      %p154 = pneg %p103
      %p155 = pneg %p100
      %p156 = scmp.lt.s32.totalorder %s14, 1
      %s157 = scalar_select %p156, %s14, 1
      %s158 = smul.addr %s157, 2
      %s159 = smul.addr %s158, 8
      %s160 = scalar_lea.vmem %s3, %s159
      %p161 = scmp.lt.s32.totalorder %s14, 1
      %s162 = scalar_select %p161, %s14, 1
      %s163 = smul.addr %s162, 2
      %s164 = smul.addr %s163, 8
      %s165 = scalar_lea.vmem %s0, %s164
      %p166 = scmp.lt.s32.totalorder %s14, 1
      %s167 = scalar_select %p166, %s14, 1
      %s168 = smul.addr %s167, 2
      %s169 = smul.addr %s168, 8
      %s170 = scalar_lea.vmem %s3, %s169
      %v171 = vld [vmem:[%s165] sm:$0xff]
      %v172 = vld [vmem:[%s165 + $0x8] sm:$0xff]
      %v173 = vld [vmem:[%s1] sm:$0xff]
      %175 = vset.pattern.permute.xlu0 0
      %176 = vperm.xlu0 %175, %v173
      %v177 = vpop.permute.xlu0 %176
      %v179 = vmul.f32 %v171, %v177
      %v180 = vmul.f32 %v172, %v177
      %v181 = vld [vmem:[%s2] sm:$0xff]
      %183 = vset.pattern.permute.xlu0 0
      %184 = vperm.xlu0 %183, %v181
      %v185 = vpop.permute.xlu0 %184
      %v187 = vadd.f32 %v179, %v185
      %v188 = vadd.f32 %v180, %v185
      %189 = vst [vmem:[%s170] sm:$0xff] %v187
      %190 = vst [vmem:[%s170 + $0x8] sm:$0xff] %v188
      %p191 = scmp.lt.s32.totalorder %s14, 1
      %s192 = scalar_select %p191, %s14, 1
      %s193 = smul.addr %s192, 2
      %s194 = smul.addr %s193, 8
      %s195 = scalar_lea.vmem %s3, %s194
      // Predicated region
      $region33: #{conv313.3} parent=31 // pred_check
        %p196 = pneg %p100
      $region34: #{conv313.3} parent=31 // pred_check_branch
        %198 = sbr.rel (%p196) target = $region36
      $region35: #{conv313.3} parent=31 // pred_region
        _
      $region36: #{conv313.3} parent=31 // pred_fallthru
        _
    $region32: #{conv313.3} parent=5 // pred_fallthru
      _
    %p199 = scmp.le.s32.totalorder 2, %s9
    // Predicated region
    $region37: #{conv313.3} parent=5 // pred_check
      %p200 = pneg %p199
    $region38: #{conv313.3} parent=5 // pred_check_branch
      %202 = sbr.rel (%p200) target = $region40
    $region39: #{conv313.3} parent=5 // pred_region
      %s203 = ssub.s32 %s9, 2
      // Predicated region
      $region41: #{conv313.3} parent=39 // pred_check
        %p204 = pneg %p106
      $region42: #{conv313.3} parent=39 // pred_check_branch
        %206 = sbr.rel (%p204) target = $region44
      $region43: #{conv313.3} parent=39 // pred_region
        %p207 = scmp.lt.s32.totalorder %s15, 1
        %s208 = scalar_select %p207, %s15, 1
        %s209 = smul.addr %s208, 2
        %s210 = smul.addr %s209, 8
        %s211 = scalar_lea.vmem %s3, %s210
      $region44: #{conv313.3} parent=39 // pred_fallthru
        _
    $region40: #{conv313.3} parent=5 // pred_fallthru
      _
  $region6: #{conv313.3} parent=0 // loop_footer
    %s13 = sadd.s32 1, %s9
  $region7: #{conv313.3} parent=0 // loop_footer_branch
    %8 = sbr.rel target = $region3
  $region8: #{conv313.3} parent=0 // loop_exit
    _

// kernel: conv313.2
$region0: #{conv313.2}
  #allocation0 [shape = 'u32[]', space=smem, size = 0x4, offset = 0x4, fixed_abs, tag = 'smem constant byte address 0x4 - core index']
  #allocation1 [shape = 'u32[144,128]{1,0:T(1,128)}', space=vmem, size = 0x12000, scoped, tag = 'internal scratch']
  %s0 = inlined_call_operand.vmem [shape: bf16[2,4,256], index: 0, kind: input, shape index: {}]
  %s1 = inlined_call_operand.vmem [shape: bf16[3,4,8], index: 1, kind: input, shape index: {}]
  %s2 = inlined_call_operand.vmem [shape: bf16[3,8,8], index: 2, kind: input, shape index: {}]
  %s3 = inlined_call_operand.vmem [shape: f32[2,8,256], index: 3, kind: output, shape index: {0}]
  %s4 = inlined_call_operand.vmem [shape: f32[2,2,8], index: 4, kind: output, shape index: {1}]
  %5 = xla_tuple %s3, %s4
  %s6 = sld [smem:[#allocation0]]
  $region53: #{conv313.2} parent=0
    _
  %s8 = ssub.s32 1, %s6
  %s9 = scalar_select 0, %s8, %s6
  loop: start=0, step=1, limit=4
  $region2: #{conv313.2} parent=0 // loop_pre_header
    _
  $region3: #{conv313.2} parent=0 // loop_header
    %s11 = sphi 0, %s15
    %p12 = scmp.ge.s32.totalorder %s11, 4
    %s21 = sphi 0, %s23
    %s24 = sphi 0, %s21
    %s25 = sphi 0, %s24
    %s41 = sphi 0, %s25
    %s45 = sphi 0, %s45
    %s47 = sphi 0, %s45
    %s48 = sphi 0, %s47
    %s62 = sphi 0, %s48
    %s66 = sphi 0, %s66
    %s68 = sphi 0, %s66
    %s69 = sphi 0, %s68
    %s83 = sphi 0, %s69
    %s89 = sphi 0, %s91
    %s92 = sphi 0, %s89
    %s93 = sphi 0, %s92
    %s109 = sphi 0, %s93
    %s115 = sphi 0, %s117
    %s118 = sphi 0, %s115
    %s119 = sphi 0, %s118
    %s135 = sphi 0, %s119
  $region4: #{conv313.2} parent=0 // loop_header_branch
    %14 = sbr.rel (%p12) target = $region8
  $region5: #{conv313.2} parent=0 // loop_body
    %s16 = ssub.s32 %s11, 1
    %s17 = ssub.s32 %s11, 2
    %s18 = sadd.s32 %s11, 1
    %s19 = ssub.s32 %s11, %s18
    %p20 = scmp.eq.s32.totalorder %s19, 0
    %s22 = sadd.s32 %s21, 1
    %s23 = scalar_select %p20, %s21, %s22
    %p26 = pneg %p20
    %p27 = scmp.eq.s32.totalorder %s11, 1
    %p28 = por %p26, %p27
    %p29 = scmp.ne.s32.totalorder %s21, %s24
    %p30 = scmp.eq.s32.totalorder %s11, 0
    %p31 = por %p29, %p30
    %p32 = scmp.ne.s32.totalorder %s21, %s24
    %p33 = scmp.eq.s32.totalorder %s16, 1
    %p34 = por %p32, %p33
    %p35 = scmp.ne.s32.totalorder %s24, %s25
    %p36 = scmp.eq.s32.totalorder %s16, 0
    %p37 = por %p35, %p36
    %p38 = scmp.ne.s32.totalorder %s24, %s25
    %p39 = scmp.eq.s32.totalorder %s17, 1
    %p40 = por %p38, %p39
    %p42 = scmp.ne.s32.totalorder %s25, %s41
    %p43 = scmp.eq.s32.totalorder %s17, 0
    %p44 = por %p42, %p43
    %s46 = sadd.s32 %s45, 1
    %p49 = scmp.eq.s32.totalorder %s11, 1
    %p50 = scmp.ne.s32.totalorder %s45, %s47
    %p51 = scmp.eq.s32.totalorder %s11, 0
    %p52 = por %p50, %p51
    %p53 = scmp.ne.s32.totalorder %s45, %s47
    %p54 = scmp.eq.s32.totalorder %s16, 1
    %p55 = por %p53, %p54
    %p56 = scmp.ne.s32.totalorder %s47, %s48
    %p57 = scmp.eq.s32.totalorder %s16, 0
    %p58 = por %p56, %p57
    %p59 = scmp.ne.s32.totalorder %s47, %s48
    %p60 = scmp.eq.s32.totalorder %s17, 1
    %p61 = por %p59, %p60
    %p63 = scmp.ne.s32.totalorder %s48, %s62
    %p64 = scmp.eq.s32.totalorder %s17, 0
    %p65 = por %p63, %p64
    %s67 = sadd.s32 %s66, 1
    %p70 = scmp.eq.s32.totalorder %s11, 1
    %p71 = scmp.ne.s32.totalorder %s66, %s68
    %p72 = scmp.eq.s32.totalorder %s11, 0
    %p73 = por %p71, %p72
    %p74 = scmp.ne.s32.totalorder %s66, %s68
    %p75 = scmp.eq.s32.totalorder %s16, 1
    %p76 = por %p74, %p75
    %p77 = scmp.ne.s32.totalorder %s68, %s69
    %p78 = scmp.eq.s32.totalorder %s16, 0
    %p79 = por %p77, %p78
    %p80 = scmp.ne.s32.totalorder %s68, %s69
    %p81 = scmp.eq.s32.totalorder %s17, 1
    %p82 = por %p80, %p81
    %p84 = scmp.ne.s32.totalorder %s69, %s83
    %p85 = scmp.eq.s32.totalorder %s17, 0
    %p86 = por %p84, %p85
    %s87 = ssub.s32 %s11, %s18
    %p88 = scmp.eq.s32.totalorder %s87, 0
    %s90 = sadd.s32 %s89, 1
    %s91 = scalar_select %p88, %s89, %s90
    %p94 = pneg %p88
    %p95 = scmp.eq.s32.totalorder %s11, 1
    %p96 = por %p94, %p95
    %p97 = scmp.ne.s32.totalorder %s89, %s92
    %p98 = scmp.eq.s32.totalorder %s11, 0
    %p99 = por %p97, %p98
    %p100 = scmp.ne.s32.totalorder %s89, %s92
    %p101 = scmp.eq.s32.totalorder %s16, 1
    %p102 = por %p100, %p101
    %p103 = scmp.ne.s32.totalorder %s92, %s93
    %p104 = scmp.eq.s32.totalorder %s16, 0
    %p105 = por %p103, %p104
    %p106 = scmp.ne.s32.totalorder %s92, %s93
    %p107 = scmp.eq.s32.totalorder %s17, 1
    %p108 = por %p106, %p107
    %p110 = scmp.ne.s32.totalorder %s93, %s109
    %p111 = scmp.eq.s32.totalorder %s17, 0
    %p112 = por %p110, %p111
    %s113 = ssub.s32 %s11, %s18
    %p114 = scmp.eq.s32.totalorder %s113, 0
    %s116 = sadd.s32 %s115, 1
    %s117 = scalar_select %p114, %s115, %s116
    %p120 = pneg %p114
    %p121 = scmp.eq.s32.totalorder %s11, 1
    %p122 = por %p120, %p121
    %p123 = scmp.ne.s32.totalorder %s115, %s118
    %p124 = scmp.eq.s32.totalorder %s11, 0
    %p125 = por %p123, %p124
    %p126 = scmp.ne.s32.totalorder %s115, %s118
    %p127 = scmp.eq.s32.totalorder %s16, 1
    %p128 = por %p126, %p127
    %p129 = scmp.ne.s32.totalorder %s118, %s119
    %p130 = scmp.eq.s32.totalorder %s16, 0
    %p131 = por %p129, %p130
    %p132 = scmp.ne.s32.totalorder %s118, %s119
    %p133 = scmp.eq.s32.totalorder %s17, 1
    %p134 = por %p132, %p133
    %p136 = scmp.ne.s32.totalorder %s119, %s135
    %p137 = scmp.eq.s32.totalorder %s17, 0
    %p138 = por %p136, %p137
    %p139 = scmp.le.s32.totalorder 1, %s11
    %p140 = scmp.lt.s32.totalorder %s11, 3
    %p141 = pnand %p139, %p140
    %p142 = pneg %p141
    // Predicated region
    $region9: #{conv313.2} parent=5 // pred_check
      _
    $region10: #{conv313.2} parent=5 // pred_check_branch
      %144 = sbr.rel (%p141) target = $region12
    $region11: #{conv313.2} parent=5 // pred_region
      %s145 = ssub.s32 %s11, 1
      // Predicated region
      $region13: #{conv313.2} parent=11 // pred_check
        %p146 = pneg %p58
      $region14: #{conv313.2} parent=11 // pred_check_branch
        %148 = sbr.rel (%p146) target = $region16
      $region15: #{conv313.2} parent=11 // pred_region
        _
      $region16: #{conv313.2} parent=11 // pred_fallthru
        _
      // Predicated region
      $region17: #{conv313.2} parent=11 // pred_check
        %p149 = pneg %p79
      $region18: #{conv313.2} parent=11 // pred_check_branch
        %151 = sbr.rel (%p149) target = $region20
      $region19: #{conv313.2} parent=11 // pred_region
        _
      $region20: #{conv313.2} parent=11 // pred_fallthru
        _
    $region12: #{conv313.2} parent=5 // pred_fallthru
      _
    %p152 = scmp.lt.s32.totalorder %s11, 2
    // Predicated region
    $region21: #{conv313.2} parent=5 // pred_check
      %p153 = pneg %p152
    $region22: #{conv313.2} parent=5 // pred_check_branch
      %155 = sbr.rel (%p153) target = $region24
    $region23: #{conv313.2} parent=5 // pred_region
      // Predicated region
      $region25: #{conv313.2} parent=23 // pred_check
        %p156 = pneg %p31
      $region26: #{conv313.2} parent=23 // pred_check_branch
        %158 = sbr.rel (%p156) target = $region28
      $region27: #{conv313.2} parent=23 // pred_region
        %p159 = scmp.lt.s32.totalorder %s11, 1
        %s160 = scalar_select %p159, %s11, 1
        %s161 = smul.addr %s160, 2
        %s162 = smul.addr %s161, 2
        %s163 = scalar_lea.vmem %s0, %s162
      $region28: #{conv313.2} parent=23 // pred_fallthru
        _
    $region24: #{conv313.2} parent=5 // pred_fallthru
      _
    %p164 = scmp.le.s32.totalorder 1, %s11
    %p165 = scmp.lt.s32.totalorder %s11, 3
    %p166 = pnand %p164, %p165
    %p167 = pneg %p166
    // Predicated region
    $region29: #{conv313.2} parent=5 // pred_check
      _
    $region30: #{conv313.2} parent=5 // pred_check_branch
      %169 = sbr.rel (%p166) target = $region32
    $region31: #{conv313.2} parent=5 // pred_region
      %s170 = ssub.s32 %s11, 1
      %p171 = scmp.lt.s32.totalorder %s16, 1
      %s172 = scalar_select %p171, %s16, 1
      %s173 = smul.addr %s172, 2
      %s174 = smul.addr %s173, 2
      %s175 = scalar_lea.vmem %s0, %s174
      %p176 = pneg %p37
      %p177 = pneg %p34
      %p178 = pneg %p58
      %p179 = pneg %p55
      %p180 = pneg %p79
      %p181 = pneg %p76
      %p182 = pneg %p105
      %p183 = pneg %p102
      %p184 = scmp.lt.s32.totalorder %s16, 1
      %s185 = scalar_select %p184, %s16, 1
      %s186 = smul.addr %s185, 2
      %s187 = smul.addr %s186, 8
      %s188 = scalar_lea.vmem %s3, %s187
      %p189 = pneg %p131
      %p190 = pneg %p128
      %p191 = scmp.lt.s32.totalorder %s16, 1
      %s192 = scalar_select %p191, %s16, 1
      %s193 = smul.addr %s192, 2
      %s194 = scalar_lea.vmem %s4, %s193
      %p195 = scmp.lt.s32.totalorder %s16, 1
      %s196 = scalar_select %p195, %s16, 1
      %s197 = smul.addr %s196, 2
      %s198 = smul.addr %s197, 2
      %s199 = scalar_lea.vmem %s0, %s198
      %p200 = scmp.lt.s32.totalorder %s16, 1
      %s201 = scalar_select %p200, %s16, 1
      %s202 = smul.addr %s201, 2
      %s203 = smul.addr %s202, 8
      %s204 = scalar_lea.vmem %s3, %s203
      %p205 = scmp.lt.s32.totalorder %s16, 1
      %s206 = scalar_select %p205, %s16, 1
      %s207 = smul.addr %s206, 2
      %s208 = scalar_lea.vmem %s4, %s207
      %v210 = vld [vmem:[%s199] sm:$0xf]
      %v211 = vmax.bf16 %v210, 0
      %v214 = vunpack.c.l.s4 1983009808
      %v215 = vunpack.c.0.s8 %v214
      %v216 = vlaneseq
      %v217 = vshrl.u32 %v216, 7
      %v218 = vsub.s32 %v215, %v217
      %v219 = vrot.slane %v211, %v218
      %v220 = vcombine.high %v219, %v219
      %223 = vxpose.xlu0.c.b16.start [1/8] %v219, 128
      %224 = vxpose.xlu0.c.b16.cont [2/8] 0, 128
      %225 = vxpose.xlu0.c.b16.cont [3/8] 0, 128
      %226 = vxpose.xlu0.c.b16.cont [4/8] 0, 128
      %227 = vxpose.xlu0.c.b16.cont [5/8] 0, 128
      %228 = vxpose.xlu0.c.b16.cont [6/8] 0, 128
      %229 = vxpose.xlu0.c.b16.cont [7/8] 0, 128
      %230 = vxpose.xlu0.c.b16.end [8/8] 0, 128
      %v231 = vpop.trf.xlu0
      %v232 = vpop.trf.xlu0
      %v233 = vpop.trf.xlu0
      %v234 = vpop.trf.xlu0
      %v235 = vpop.trf.xlu0
      %v236 = vpop.trf.xlu0
      %v237 = vpop.trf.xlu0
      %v238 = vpop.trf.xlu0
      %239 = vxpose.xlu0.c.b16.start [1/8] %v220, 128
      %240 = vxpose.xlu0.c.b16.cont [2/8] 0, 128
      %241 = vxpose.xlu0.c.b16.cont [3/8] 0, 128
      %242 = vxpose.xlu0.c.b16.cont [4/8] 0, 128
      %243 = vxpose.xlu0.c.b16.cont [5/8] 0, 128
      %244 = vxpose.xlu0.c.b16.cont [6/8] 0, 128
      %245 = vxpose.xlu0.c.b16.cont [7/8] 0, 128
      %246 = vxpose.xlu0.c.b16.end [8/8] 0, 128
      %v247 = vpop.trf.xlu0
      %v248 = vpop.trf.xlu0
      %v249 = vpop.trf.xlu0
      %v250 = vpop.trf.xlu0
      %v251 = vpop.trf.xlu0
      %v252 = vpop.trf.xlu0
      %v253 = vpop.trf.xlu0
      %v254 = vpop.trf.xlu0
      %v256 = vshrl.u32 %v231, 16
      %v258 = vrot.slane %v256, 7
      %v259 = vshll.u32 %v231, 16
      %v261 = vor.u32 %v258, %v259
      %v263 = vshrl.u32 %v232, 16
      %v265 = vrot.slane %v263, 7
      %v266 = vshll.u32 %v232, 16
      %v268 = vor.u32 %v265, %v266
      %v270 = vshrl.u32 %v233, 16
      %v272 = vrot.slane %v270, 7
      %v273 = vshll.u32 %v233, 16
      %v275 = vor.u32 %v272, %v273
      %v277 = vshrl.u32 %v234, 16
      %v279 = vrot.slane %v277, 7
      %v280 = vshll.u32 %v234, 16
      %v282 = vor.u32 %v279, %v280
      %v284 = vshrl.u32 %v235, 16
      %v286 = vrot.slane %v284, 7
      %v287 = vshll.u32 %v235, 16
      %v289 = vor.u32 %v286, %v287
      %v291 = vshrl.u32 %v236, 16
      %v293 = vrot.slane %v291, 7
      %v294 = vshll.u32 %v236, 16
      %v296 = vor.u32 %v293, %v294
      %v298 = vshrl.u32 %v237, 16
      %v300 = vrot.slane %v298, 7
      %v301 = vshll.u32 %v237, 16
      %v303 = vor.u32 %v300, %v301
      %v305 = vshrl.u32 %v238, 16
      %v307 = vrot.slane %v305, 7
      %v308 = vshll.u32 %v238, 16
      %v310 = vor.u32 %v307, %v308
      %v312 = vshrl.u32 %v247, 16
      %v314 = vrot.slane %v312, 7
      %v315 = vshll.u32 %v247, 16
      %v317 = vor.u32 %v314, %v315
      %v319 = vshrl.u32 %v248, 16
      %v321 = vrot.slane %v319, 7
      %v322 = vshll.u32 %v248, 16
      %v324 = vor.u32 %v321, %v322
      %v326 = vshrl.u32 %v249, 16
      %v328 = vrot.slane %v326, 7
      %v329 = vshll.u32 %v249, 16
      %v331 = vor.u32 %v328, %v329
      %v333 = vshrl.u32 %v250, 16
      %v335 = vrot.slane %v333, 7
      %v336 = vshll.u32 %v250, 16
      %v338 = vor.u32 %v335, %v336
      %v340 = vshrl.u32 %v251, 16
      %v342 = vrot.slane %v340, 7
      %v343 = vshll.u32 %v251, 16
      %v345 = vor.u32 %v342, %v343
      %v347 = vshrl.u32 %v252, 16
      %v349 = vrot.slane %v347, 7
      %v350 = vshll.u32 %v252, 16
      %v352 = vor.u32 %v349, %v350
      %v354 = vshrl.u32 %v253, 16
      %v356 = vrot.slane %v354, 7
      %v357 = vshll.u32 %v253, 16
      %v359 = vor.u32 %v356, %v357
      %v361 = vshrl.u32 %v254, 16
      %v363 = vrot.slane %v361, 7
      %v364 = vshll.u32 %v254, 16
      %v366 = vor.u32 %v363, %v364
      %vm399 = vcmask 1040384
      %vm400 = vsmask.f32 256
      %vm401 = vmand %vm399, %vm400
      %v402 = vsel %vm401, 0, %v261
      %v403 = vsel %vm401, 0, %v268
      %v404 = vsel %vm401, 0, %v275
      %v405 = vsel %vm401, 0, %v282
      %v406 = vsel %vm401, 0, %v289
      %v407 = vsel %vm401, 0, %v296
      %v408 = vsel %vm401, 0, %v303
      %v409 = vsel %vm401, 0, %v310
      %v410 = vsel %vm401, 0, %v317
      %v411 = vsel %vm401, 0, %v324
      %v412 = vsel %vm401, 0, %v331
      %v413 = vsel %vm401, 0, %v338
      %v414 = vsel %vm401, 0, %v345
      %v415 = vsel %vm401, 0, %v352
      %v416 = vsel %vm401, 0, %v359
      %v417 = vsel %vm401, 0, %v366
      %v418 = vsel %vm401, %v258, 0
      %v419 = vsel %vm401, %v265, 0
      %v420 = vsel %vm401, %v272, 0
      %v421 = vsel %vm401, %v279, 0
      %v422 = vsel %vm401, %v286, 0
      %v423 = vsel %vm401, %v293, 0
      %v424 = vsel %vm401, %v300, 0
      %v425 = vsel %vm401, %v307, 0
      %v426 = vsel %vm401, %v314, 0
      %v427 = vsel %vm401, %v321, 0
      %v428 = vsel %vm401, %v328, 0
      %v429 = vsel %vm401, %v335, 0
      %v430 = vsel %vm401, %v342, 0
      %v431 = vsel %vm401, %v349, 0
      %v432 = vsel %vm401, %v356, 0
      %v433 = vsel %vm401, %v363, 0
      %v434 = vld [vmem:[%s1] sm:$0x3]
      %vm435 = vsmask.f32 7424
      %v437 = vshrl.u32 %v402, 16
      %v439 = vshll.u32 %v402, 16
      %v441 = vrot.slane %v439, 1
      %v442 = vor.u32 %v437, %v441
      %v444 = vshll.u32 %v418, 16
      %v446 = vrot.slane %v444, 1
      %v447 = vsel %vm435, %v442, %v446
      %v449 = vshrl.u32 %v403, 16
      %v451 = vshll.u32 %v403, 16
      %v453 = vrot.slane %v451, 1
      %v454 = vor.u32 %v449, %v453
      %v456 = vshll.u32 %v419, 16
      %v458 = vrot.slane %v456, 1
      %v459 = vsel %vm435, %v454, %v458
      %v461 = vshrl.u32 %v404, 16
      %v463 = vshll.u32 %v404, 16
      %v465 = vrot.slane %v463, 1
      %v466 = vor.u32 %v461, %v465
      %v468 = vshll.u32 %v420, 16
      %v470 = vrot.slane %v468, 1
      %v471 = vsel %vm435, %v466, %v470
      %v473 = vshrl.u32 %v405, 16
      %v475 = vshll.u32 %v405, 16
      %v477 = vrot.slane %v475, 1
      %v478 = vor.u32 %v473, %v477
      %v480 = vshll.u32 %v421, 16
      %v482 = vrot.slane %v480, 1
      %v483 = vsel %vm435, %v478, %v482
      %v485 = vshrl.u32 %v406, 16
      %v487 = vshll.u32 %v406, 16
      %v489 = vrot.slane %v487, 1
      %v490 = vor.u32 %v485, %v489
      %v492 = vshll.u32 %v422, 16
      %v494 = vrot.slane %v492, 1
      %v495 = vsel %vm435, %v490, %v494
      %v497 = vshrl.u32 %v407, 16
      %v499 = vshll.u32 %v407, 16
      %v501 = vrot.slane %v499, 1
      %v502 = vor.u32 %v497, %v501
      %v504 = vshll.u32 %v423, 16
      %v506 = vrot.slane %v504, 1
      %v507 = vsel %vm435, %v502, %v506
      %v509 = vshrl.u32 %v408, 16
      %v511 = vshll.u32 %v408, 16
      %v513 = vrot.slane %v511, 1
      %v514 = vor.u32 %v509, %v513
      %v516 = vshll.u32 %v424, 16
      %v518 = vrot.slane %v516, 1
      %v519 = vsel %vm435, %v514, %v518
      %v521 = vshrl.u32 %v409, 16
      %v523 = vshll.u32 %v409, 16
      %v525 = vrot.slane %v523, 1
      %v526 = vor.u32 %v521, %v525
      %v528 = vshll.u32 %v425, 16
      %v530 = vrot.slane %v528, 1
      %v531 = vsel %vm435, %v526, %v530
      %v533 = vshrl.u32 %v410, 16
      %v535 = vshll.u32 %v410, 16
      %v537 = vrot.slane %v535, 1
      %v538 = vor.u32 %v533, %v537
      %v540 = vshll.u32 %v426, 16
      %v542 = vrot.slane %v540, 1
      %v543 = vsel %vm435, %v538, %v542
      %v545 = vshrl.u32 %v411, 16
      %v547 = vshll.u32 %v411, 16
      %v549 = vrot.slane %v547, 1
      %v550 = vor.u32 %v545, %v549
      %v552 = vshll.u32 %v427, 16
      %v554 = vrot.slane %v552, 1
      %v555 = vsel %vm435, %v550, %v554
      %v557 = vshrl.u32 %v412, 16
      %v559 = vshll.u32 %v412, 16
      %v561 = vrot.slane %v559, 1
      %v562 = vor.u32 %v557, %v561
      %v564 = vshll.u32 %v428, 16
      %v566 = vrot.slane %v564, 1
      %v567 = vsel %vm435, %v562, %v566
      %v569 = vshrl.u32 %v413, 16
      %v571 = vshll.u32 %v413, 16
      %v573 = vrot.slane %v571, 1
      %v574 = vor.u32 %v569, %v573
      %v576 = vshll.u32 %v429, 16
      %v578 = vrot.slane %v576, 1
      %v579 = vsel %vm435, %v574, %v578
      %v581 = vshrl.u32 %v414, 16
      %v583 = vshll.u32 %v414, 16
      %v585 = vrot.slane %v583, 1
      %v586 = vor.u32 %v581, %v585
      %v588 = vshll.u32 %v430, 16
      %v590 = vrot.slane %v588, 1
      %v591 = vsel %vm435, %v586, %v590
      %v593 = vshrl.u32 %v415, 16
      %v595 = vshll.u32 %v415, 16
      %v597 = vrot.slane %v595, 1
      %v598 = vor.u32 %v593, %v597
      %v600 = vshll.u32 %v431, 16
      %v602 = vrot.slane %v600, 1
      %v603 = vsel %vm435, %v598, %v602
      %v605 = vshrl.u32 %v416, 16
      %v607 = vshll.u32 %v416, 16
      %v609 = vrot.slane %v607, 1
      %v610 = vor.u32 %v605, %v609
      %v612 = vshll.u32 %v432, 16
      %v614 = vrot.slane %v612, 1
      %v615 = vsel %vm435, %v610, %v614
      %v617 = vshrl.u32 %v417, 16
      %v619 = vshll.u32 %v417, 16
      %v621 = vrot.slane %v619, 1
      %v622 = vor.u32 %v617, %v621
      %v624 = vshll.u32 %v433, 16
      %v626 = vrot.slane %v624, 1
      %v627 = vsel %vm435, %v622, %v626
      %s628 = scalar_lea.vmem %s1, 2
      %v629 = vld [vmem:[%s628] sm:$0x3]
      %vm630 = vcmask 31744
      %v632 = vsel %vm630, %v447, 0
      %v635 = vsel %vm630, %v459, 0
      %v638 = vsel %vm630, %v471, 0
      %v641 = vsel %vm630, %v483, 0
      %v644 = vsel %vm630, %v495, 0
      %v647 = vsel %vm630, %v507, 0
      %v650 = vsel %vm630, %v519, 0
      %v653 = vsel %vm630, %v531, 0
      %v656 = vsel %vm630, %v543, 0
      %v659 = vsel %vm630, %v555, 0
      %v662 = vsel %vm630, %v567, 0
      %v665 = vsel %vm630, %v579, 0
      %v668 = vsel %vm630, %v591, 0
      %v671 = vsel %vm630, %v603, 0
      %v674 = vsel %vm630, %v615, 0
      %v677 = vsel %vm630, %v627, 0
      %vm679 = vcmask 1041408
      %v681 = vsel %vm679, %v629, 0
      %683 = vmatprep.subr.bf16.mxu0 0
      %684 = vmatpush1.bf16.msra.mxu0 %v681
      %685 = vmatprep.subr.bf16.mxu0 0
      %686 = vmatpush1.bf16.msra.mxu0 0
      %687 = vmatprep.subr.bf16.mxu0 0
      %688 = vmatpush1.bf16.msra.mxu0 0
      %689 = vmatprep.subr.bf16.mxu0 0
      %690 = vmatpush1.bf16.msra.mxu0 0
      %691 = vmatprep.subr.bf16.mxu0 0
      %692 = vmatpush1.bf16.msra.mxu0 0
      %693 = vmatprep.subr.bf16.mxu0 0
      %694 = vmatpush1.bf16.msra.mxu0 0
      %695 = vmatprep.subr.bf16.mxu0 0
      %696 = vmatpush1.bf16.msra.mxu0 0
      %697 = vmatprep.subr.bf16.mxu0 0
      %698 = vmatpush1.bf16.msra.mxu0 0
      %699 = vmatprep.subr.bf16.mxu0 0
      %700 = vmatpush1.bf16.msra.mxu0 0
      %701 = vmatprep.subr.bf16.mxu0 0
      %702 = vmatpush1.bf16.msra.mxu0 0
      %703 = vmatprep.subr.bf16.mxu0 0
      %704 = vmatpush1.bf16.msra.mxu0 0
      %705 = vmatprep.subr.bf16.mxu0 0
      %706 = vmatpush1.bf16.msra.mxu0 0
      %707 = vmatprep.subr.bf16.mxu0 0
      %708 = vmatpush1.bf16.msra.mxu0 0
      %709 = vmatprep.subr.bf16.mxu0 0
      %710 = vmatpush1.bf16.msra.mxu0 0
      %711 = vmatprep.subr.bf16.mxu0 0
      %712 = vmatpush1.bf16.msra.mxu0 0
      %713 = vmatprep.subr.bf16.mxu0 0
      %714 = vmatpush1.bf16.msra.mxu0 0
      %715 = vmatprep.mubr.bf16.mxu0 0
      %716 = vmatmul.mubr.bf16.gmra.mrb[0].mxu0 %v632
      %v717 = vpop.f32.mrb[0].mxu0
      %v718 = vadd.f32 0.0, %v717
      %v719 = vpop.f32.mrb[0].mxu0
      %v720 = vpop.f32.mrb[0].mxu0
      %v721 = vadd.f32 0.0, %v720
      %v722 = vpop.f32.mrb[0].mxu0
      %723 = vmatprep.mubr.bf16.mxu0 0
      %724 = vmatmul.mubr.bf16.gmra.mrb[0].mxu0 %v635
      %v725 = vpop.f32.mrb[0].mxu0
      %v726 = vadd.f32 0.0, %v725
      %v727 = vpop.f32.mrb[0].mxu0
      %v728 = vpop.f32.mrb[0].mxu0
      %v729 = vadd.f32 0.0, %v728
      %v730 = vpop.f32.mrb[0].mxu0
      %731 = vmatprep.mubr.bf16.mxu0 0
      %732 = vmatmul.mubr.bf16.gmra.mrb[0].mxu0 %v638
      %v733 = vpop.f32.mrb[0].mxu0
      %v734 = vadd.f32 0.0, %v733
      %v735 = vpop.f32.mrb[0].mxu0
      %v736 = vpop.f32.mrb[0].mxu0
      %v737 = vadd.f32 0.0, %v736
      %v738 = vpop.f32.mrb[0].mxu0
      %739 = vmatprep.mubr.bf16.mxu0 0
      %740 = vmatmul.mubr.bf16.gmra.mrb[0].mxu0 %v641
      %v741 = vpop.f32.mrb[0].mxu0
      %v742 = vadd.f32 0.0, %v741
      %v743 = vpop.f32.mrb[0].mxu0
      %v744 = vpop.f32.mrb[0].mxu0
      %v745 = vadd.f32 0.0, %v744
      %v746 = vpop.f32.mrb[0].mxu0
      %747 = vmatprep.mubr.bf16.mxu0 0
      %748 = vmatmul.mubr.bf16.gmra.mrb[0].mxu0 %v644
      %v749 = vpop.f32.mrb[0].mxu0
      %v750 = vadd.f32 0.0, %v749
      %v751 = vpop.f32.mrb[0].mxu0
      %v752 = vpop.f32.mrb[0].mxu0
      %v753 = vadd.f32 0.0, %v752
      %v754 = vpop.f32.mrb[0].mxu0
      %755 = vmatprep.mubr.bf16.mxu0 0
      %756 = vmatmul.mubr.bf16.gmra.mrb[0].mxu0 %v647
      %v757 = vpop.f32.mrb[0].mxu0
      %v758 = vadd.f32 0.0, %v757
      %v759 = vpop.f32.mrb[0].mxu0
      %v760 = vpop.f32.mrb[0].mxu0
      %v761 = vadd.f32 0.0, %v760
      %v762 = vpop.f32.mrb[0].mxu0
      %763 = vmatprep.mubr.bf16.mxu0 0
      %764 = vmatmul.mubr.bf16.gmra.mrb[0].mxu0 %v650
      %v765 = vpop.f32.mrb[0].mxu0
      %v766 = vadd.f32 0.0, %v765
      %v767 = vpop.f32.mrb[0].mxu0
      %v768 = vpop.f32.mrb[0].mxu0
      %v769 = vadd.f32 0.0, %v768
      %v770 = vpop.f32.mrb[0].mxu0
      %771 = vmatprep.mubr.bf16.mxu0 0
      %772 = vmatmul.mubr.bf16.gmra.mrb[0].mxu0 %v653
      %v773 = vpop.f32.mrb[0].mxu0
      %v774 = vadd.f32 0.0, %v773
      %v775 = vpop.f32.mrb[0].mxu0
      %v776 = vpop.f32.mrb[0].mxu0
      %v777 = vadd.f32 0.0, %v776
      %v778 = vpop.f32.mrb[0].mxu0
      %779 = vmatprep.mubr.bf16.mxu0 0
      %780 = vmatmul.mubr.bf16.gmra.mrb[0].mxu0 %v656
      %v781 = vpop.f32.mrb[0].mxu0
      %v782 = vadd.f32 0.0, %v781
      %v783 = vpop.f32.mrb[0].mxu0
      %v784 = vpop.f32.mrb[0].mxu0
      %v785 = vadd.f32 0.0, %v784
      %v786 = vpop.f32.mrb[0].mxu0
      %787 = vmatprep.mubr.bf16.mxu0 0
      %788 = vmatmul.mubr.bf16.gmra.mrb[0].mxu0 %v659
      %v789 = vpop.f32.mrb[0].mxu0
      %v790 = vadd.f32 0.0, %v789
      %v791 = vpop.f32.mrb[0].mxu0
      %v792 = vpop.f32.mrb[0].mxu0
      %v793 = vadd.f32 0.0, %v792
      %v794 = vpop.f32.mrb[0].mxu0
      %795 = vmatprep.mubr.bf16.mxu0 0
      %796 = vmatmul.mubr.bf16.gmra.mrb[0].mxu0 %v662
      %v797 = vpop.f32.mrb[0].mxu0
      %v798 = vadd.f32 0.0, %v797
      %v799 = vpop.f32.mrb[0].mxu0
      %v800 = vpop.f32.mrb[0].mxu0
      %v801 = vadd.f32 0.0, %v800
      %v802 = vpop.f32.mrb[0].mxu0
      %803 = vmatprep.mubr.bf16.mxu0 0
      %804 = vmatmul.mubr.bf16.gmra.mrb[0].mxu0 %v665
      %v805 = vpop.f32.mrb[0].mxu0
      %v806 = vadd.f32 0.0, %v805
      %v807 = vpop.f32.mrb[0].mxu0
      %v808 = vpop.f32.mrb[0].mxu0
      %v809 = vadd.f32 0.0, %v808
      %v810 = vpop.f32.mrb[0].mxu0
      %811 = vmatprep.mubr.bf16.mxu0 0
      %812 = vmatmul.mubr.bf16.gmra.mrb[0].mxu0 %v668
      %v813 = vpop.f32.mrb[0].mxu0
      %v814 = vadd.f32 0.0, %v813
      %v815 = vpop.f32.mrb[0].mxu0
      %v816 = vpop.f32.mrb[0].mxu0
      %v817 = vadd.f32 0.0, %v816
      %v818 = vpop.f32.mrb[0].mxu0
      %819 = vmatprep.mubr.bf16.mxu0 0
      %820 = vmatmul.mubr.bf16.gmra.mrb[0].mxu0 %v671
      %v821 = vpop.f32.mrb[0].mxu0
      %v822 = vadd.f32 0.0, %v821
      %v823 = vpop.f32.mrb[0].mxu0
      %v824 = vpop.f32.mrb[0].mxu0
      %v825 = vadd.f32 0.0, %v824
      %v826 = vpop.f32.mrb[0].mxu0
      %827 = vmatprep.mubr.bf16.mxu0 0
      %828 = vmatmul.mubr.bf16.gmra.mrb[0].mxu0 %v674
      %v829 = vpop.f32.mrb[0].mxu0
      %v830 = vadd.f32 0.0, %v829
      %v831 = vpop.f32.mrb[0].mxu0
      %v832 = vpop.f32.mrb[0].mxu0
      %v833 = vadd.f32 0.0, %v832
      %v834 = vpop.f32.mrb[0].mxu0
      %835 = vmatprep.mubr.bf16.mxu0 0
      %836 = vmatmul.mubr.bf16.gmra.mrb[0].mxu0 %v677
      %v837 = vpop.f32.mrb[0].mxu0
      %v838 = vadd.f32 0.0, %v837
      %v839 = vpop.f32.mrb[0].mxu0
      %v840 = vpop.f32.mrb[0].mxu0
      %v841 = vadd.f32 0.0, %v840
      %v842 = vpop.f32.mrb[0].mxu0
      %843 = vdwg.mxu0
      %v844 = vsel %vm630, %v402, 0
      %v846 = vsel %vm630, %v403, 0
      %v848 = vsel %vm630, %v404, 0
      %v850 = vsel %vm630, %v405, 0
      %v852 = vsel %vm630, %v406, 0
      %v854 = vsel %vm630, %v407, 0
      %v856 = vsel %vm630, %v408, 0
      %v858 = vsel %vm630, %v409, 0
      %v860 = vsel %vm630, %v410, 0
      %v862 = vsel %vm630, %v411, 0
      %v864 = vsel %vm630, %v412, 0
      %v866 = vsel %vm630, %v413, 0
      %v868 = vsel %vm630, %v414, 0
      %v870 = vsel %vm630, %v415, 0
      %v872 = vsel %vm630, %v416, 0
      %v874 = vsel %vm630, %v417, 0
      %v877 = vsel %vm679, %v434, 0
      %879 = vmatprep.subr.bf16.mxu0 0
      %880 = vmatpush1.bf16.msra.mxu0 %v877
      %881 = vmatprep.subr.bf16.mxu0 0
      %882 = vmatpush1.bf16.msra.mxu0 0
      %883 = vmatprep.subr.bf16.mxu0 0
      %884 = vmatpush1.bf16.msra.mxu0 0
      %885 = vmatprep.subr.bf16.mxu0 0
      %886 = vmatpush1.bf16.msra.mxu0 0
      %887 = vmatprep.subr.bf16.mxu0 0
      %888 = vmatpush1.bf16.msra.mxu0 0
      %889 = vmatprep.subr.bf16.mxu0 0
      %890 = vmatpush1.bf16.msra.mxu0 0
      %891 = vmatprep.subr.bf16.mxu0 0
      %892 = vmatpush1.bf16.msra.mxu0 0
      %893 = vmatprep.subr.bf16.mxu0 0
      %894 = vmatpush1.bf16.msra.mxu0 0
      %895 = vmatprep.subr.bf16.mxu0 0
      %896 = vmatpush1.bf16.msra.mxu0 0
      %897 = vmatprep.subr.bf16.mxu0 0
      %898 = vmatpush1.bf16.msra.mxu0 0
      %899 = vmatprep.subr.bf16.mxu0 0
      %900 = vmatpush1.bf16.msra.mxu0 0
      %901 = vmatprep.subr.bf16.mxu0 0
      %902 = vmatpush1.bf16.msra.mxu0 0
      %903 = vmatprep.subr.bf16.mxu0 0
      %904 = vmatpush1.bf16.msra.mxu0 0
      %905 = vmatprep.subr.bf16.mxu0 0
      %906 = vmatpush1.bf16.msra.mxu0 0
      %907 = vmatprep.subr.bf16.mxu0 0
      %908 = vmatpush1.bf16.msra.mxu0 0
      %909 = vmatprep.subr.bf16.mxu0 0
      %910 = vmatpush1.bf16.msra.mxu0 0
      %911 = vmatprep.mubr.bf16.mxu0 0
      %912 = vmatmul.mubr.bf16.gmra.mrb[0].mxu0 %v844
      %v913 = vpop.f32.mrb[0].mxu0
      %v914 = vadd.f32 %v718, %v913
      %v915 = vpop.f32.mrb[0].mxu0
      %v916 = vpop.f32.mrb[0].mxu0
      %v917 = vadd.f32 %v721, %v916
      %v918 = vpop.f32.mrb[0].mxu0
      %919 = vmatprep.mubr.bf16.mxu0 0
      %920 = vmatmul.mubr.bf16.gmra.mrb[0].mxu0 %v846
      %v921 = vpop.f32.mrb[0].mxu0
      %v922 = vadd.f32 %v726, %v921
      %v923 = vpop.f32.mrb[0].mxu0
      %v924 = vpop.f32.mrb[0].mxu0
      %v925 = vadd.f32 %v729, %v924
      %v926 = vpop.f32.mrb[0].mxu0
      %927 = vmatprep.mubr.bf16.mxu0 0
      %928 = vmatmul.mubr.bf16.gmra.mrb[0].mxu0 %v848
      %v929 = vpop.f32.mrb[0].mxu0
      %v930 = vadd.f32 %v734, %v929
      %v931 = vpop.f32.mrb[0].mxu0
      %v932 = vpop.f32.mrb[0].mxu0
      %v933 = vadd.f32 %v737, %v932
      %v934 = vpop.f32.mrb[0].mxu0
      %935 = vmatprep.mubr.bf16.mxu0 0
      %936 = vmatmul.mubr.bf16.gmra.mrb[0].mxu0 %v850
      %v937 = vpop.f32.mrb[0].mxu0
      %v938 = vadd.f32 %v742, %v937
      %v939 = vpop.f32.mrb[0].mxu0
      %v940 = vpop.f32.mrb[0].mxu0
      %v941 = vadd.f32 %v745, %v940
      %v942 = vpop.f32.mrb[0].mxu0
      %943 = vmatprep.mubr.bf16.mxu0 0
      %944 = vmatmul.mubr.bf16.gmra.mrb[0].mxu0 %v852
      %v945 = vpop.f32.mrb[0].mxu0
      %v946 = vadd.f32 %v750, %v945
      %v947 = vpop.f32.mrb[0].mxu0
      %v948 = vpop.f32.mrb[0].mxu0
      %v949 = vadd.f32 %v753, %v948
      %v950 = vpop.f32.mrb[0].mxu0
      %951 = vmatprep.mubr.bf16.mxu0 0
      %952 = vmatmul.mubr.bf16.gmra.mrb[0].mxu0 %v854
      %v953 = vpop.f32.mrb[0].mxu0
      %v954 = vadd.f32 %v758, %v953
      %v955 = vpop.f32.mrb[0].mxu0
      %v956 = vpop.f32.mrb[0].mxu0
      %v957 = vadd.f32 %v761, %v956
      %v958 = vpop.f32.mrb[0].mxu0
      %959 = vmatprep.mubr.bf16.mxu0 0
      %960 = vmatmul.mubr.bf16.gmra.mrb[0].mxu0 %v856
      %v961 = vpop.f32.mrb[0].mxu0
      %v962 = vadd.f32 %v766, %v961
      %v963 = vpop.f32.mrb[0].mxu0
      %v964 = vpop.f32.mrb[0].mxu0
      %v965 = vadd.f32 %v769, %v964
      %v966 = vpop.f32.mrb[0].mxu0
      %967 = vmatprep.mubr.bf16.mxu0 0
      %968 = vmatmul.mubr.bf16.gmra.mrb[0].mxu0 %v858
      %v969 = vpop.f32.mrb[0].mxu0
      %v970 = vadd.f32 %v774, %v969
      %v971 = vpop.f32.mrb[0].mxu0
      %v972 = vpop.f32.mrb[0].mxu0
      %v973 = vadd.f32 %v777, %v972
      %v974 = vpop.f32.mrb[0].mxu0
      %975 = vmatprep.mubr.bf16.mxu0 0
      %976 = vmatmul.mubr.bf16.gmra.mrb[0].mxu0 %v860
      %v977 = vpop.f32.mrb[0].mxu0
      %v978 = vadd.f32 %v782, %v977
      %v979 = vpop.f32.mrb[0].mxu0
      %v980 = vpop.f32.mrb[0].mxu0
      %v981 = vadd.f32 %v785, %v980
      %v982 = vpop.f32.mrb[0].mxu0
      %983 = vmatprep.mubr.bf16.mxu0 0
      %984 = vmatmul.mubr.bf16.gmra.mrb[0].mxu0 %v862
      %v985 = vpop.f32.mrb[0].mxu0
      %v986 = vadd.f32 %v790, %v985
      %v987 = vpop.f32.mrb[0].mxu0
      %v988 = vpop.f32.mrb[0].mxu0
      %v989 = vadd.f32 %v793, %v988
      %v990 = vpop.f32.mrb[0].mxu0
      %991 = vmatprep.mubr.bf16.mxu0 0
      %992 = vmatmul.mubr.bf16.gmra.mrb[0].mxu0 %v864
      %v993 = vpop.f32.mrb[0].mxu0
      %v994 = vadd.f32 %v798, %v993
      %v995 = vpop.f32.mrb[0].mxu0
      %v996 = vpop.f32.mrb[0].mxu0
      %v997 = vadd.f32 %v801, %v996
      %v998 = vpop.f32.mrb[0].mxu0
      %999 = vmatprep.mubr.bf16.mxu0 0
      %1000 = vmatmul.mubr.bf16.gmra.mrb[0].mxu0 %v866
      %v1001 = vpop.f32.mrb[0].mxu0
      %v1002 = vadd.f32 %v806, %v1001
      %v1003 = vpop.f32.mrb[0].mxu0
      %v1004 = vpop.f32.mrb[0].mxu0
      %v1005 = vadd.f32 %v809, %v1004
      %v1006 = vpop.f32.mrb[0].mxu0
      %1007 = vmatprep.mubr.bf16.mxu0 0
      %1008 = vmatmul.mubr.bf16.gmra.mrb[0].mxu0 %v868
      %v1009 = vpop.f32.mrb[0].mxu0
      %v1010 = vadd.f32 %v814, %v1009
      %v1011 = vpop.f32.mrb[0].mxu0
      %v1012 = vpop.f32.mrb[0].mxu0
      %v1013 = vadd.f32 %v817, %v1012
      %v1014 = vpop.f32.mrb[0].mxu0
      %1015 = vmatprep.mubr.bf16.mxu0 0
      %1016 = vmatmul.mubr.bf16.gmra.mrb[0].mxu0 %v870
      %v1017 = vpop.f32.mrb[0].mxu0
      %v1018 = vadd.f32 %v822, %v1017
      %v1019 = vpop.f32.mrb[0].mxu0
      %v1020 = vpop.f32.mrb[0].mxu0
      %v1021 = vadd.f32 %v825, %v1020
      %v1022 = vpop.f32.mrb[0].mxu0
      %1023 = vmatprep.mubr.bf16.mxu0 0
      %1024 = vmatmul.mubr.bf16.gmra.mrb[0].mxu0 %v872
      %v1025 = vpop.f32.mrb[0].mxu0
      %v1026 = vadd.f32 %v830, %v1025
      %v1027 = vpop.f32.mrb[0].mxu0
      %v1028 = vpop.f32.mrb[0].mxu0
      %v1029 = vadd.f32 %v833, %v1028
      %v1030 = vpop.f32.mrb[0].mxu0
      %1031 = vmatprep.mubr.bf16.mxu0 0
      %1032 = vmatmul.mubr.bf16.gmra.mrb[0].mxu0 %v874
      %v1033 = vpop.f32.mrb[0].mxu0
      %v1034 = vadd.f32 %v838, %v1033
      %v1035 = vpop.f32.mrb[0].mxu0
      %v1036 = vpop.f32.mrb[0].mxu0
      %v1037 = vadd.f32 %v841, %v1036
      %v1038 = vpop.f32.mrb[0].mxu0
      %1039 = vdwg.mxu0
      %vm1072 = vcmask 1046528
      %v1073 = vrot.slane %v402, 1
      %v1074 = vrot.slane %v418, 1
      %v1075 = vsel %vm1072, %v1073, %v1074
      %v1076 = vrot.slane %v403, 1
      %v1077 = vrot.slane %v419, 1
      %v1078 = vsel %vm1072, %v1076, %v1077
      %v1079 = vrot.slane %v404, 1
      %v1080 = vrot.slane %v420, 1
      %v1081 = vsel %vm1072, %v1079, %v1080
      %v1082 = vrot.slane %v405, 1
      %v1083 = vrot.slane %v421, 1
      %v1084 = vsel %vm1072, %v1082, %v1083
      %v1085 = vrot.slane %v406, 1
      %v1086 = vrot.slane %v422, 1
      %v1087 = vsel %vm1072, %v1085, %v1086
      %v1088 = vrot.slane %v407, 1
      %v1089 = vrot.slane %v423, 1
      %v1090 = vsel %vm1072, %v1088, %v1089
      %v1091 = vrot.slane %v408, 1
      %v1092 = vrot.slane %v424, 1
      %v1093 = vsel %vm1072, %v1091, %v1092
      %v1094 = vrot.slane %v409, 1
      %v1095 = vrot.slane %v425, 1
      %v1096 = vsel %vm1072, %v1094, %v1095
      %v1097 = vrot.slane %v410, 1
      %v1098 = vrot.slane %v426, 1
      %v1099 = vsel %vm1072, %v1097, %v1098
      %v1100 = vrot.slane %v411, 1
      %v1101 = vrot.slane %v427, 1
      %v1102 = vsel %vm1072, %v1100, %v1101
      %v1103 = vrot.slane %v412, 1
      %v1104 = vrot.slane %v428, 1
      %v1105 = vsel %vm1072, %v1103, %v1104
      %v1106 = vrot.slane %v413, 1
      %v1107 = vrot.slane %v429, 1
      %v1108 = vsel %vm1072, %v1106, %v1107
      %v1109 = vrot.slane %v414, 1
      %v1110 = vrot.slane %v430, 1
      %v1111 = vsel %vm1072, %v1109, %v1110
      %v1112 = vrot.slane %v415, 1
      %v1113 = vrot.slane %v431, 1
      %v1114 = vsel %vm1072, %v1112, %v1113
      %v1115 = vrot.slane %v416, 1
      %v1116 = vrot.slane %v432, 1
      %v1117 = vsel %vm1072, %v1115, %v1116
      %v1118 = vrot.slane %v417, 1
      %v1119 = vrot.slane %v433, 1
      %v1120 = vsel %vm1072, %v1118, %v1119
      %s1121 = scalar_lea.vmem %s1, 4
      %v1122 = vld [vmem:[%s1121] sm:$0x3]
      %v1124 = vsel %vm630, %v1075, 0
      %v1127 = vsel %vm630, %v1078, 0
      %v1130 = vsel %vm630, %v1081, 0
      %v1133 = vsel %vm630, %v1084, 0
      %v1136 = vsel %vm630, %v1087, 0
      %v1139 = vsel %vm630, %v1090, 0
      %v1142 = vsel %vm630, %v1093, 0
      %v1145 = vsel %vm630, %v1096, 0
      %v1148 = vsel %vm630, %v1099, 0
      %v1151 = vsel %vm630, %v1102, 0
      %v1154 = vsel %vm630, %v1105, 0
      %v1157 = vsel %vm630, %v1108, 0
      %v1160 = vsel %vm630, %v1111, 0
      %v1163 = vsel %vm630, %v1114, 0
      %v1166 = vsel %vm630, %v1117, 0
      %v1169 = vsel %vm630, %v1120, 0
      %v1172 = vsel %vm679, %v1122, 0
      %1174 = vmatprep.subr.bf16.mxu0 0
      %1175 = vmatpush1.bf16.msra.mxu0 %v1172
      %1176 = vmatprep.subr.bf16.mxu0 0
      %1177 = vmatpush1.bf16.msra.mxu0 0
      %1178 = vmatprep.subr.bf16.mxu0 0
      %1179 = vmatpush1.bf16.msra.mxu0 0
      %1180 = vmatprep.subr.bf16.mxu0 0
      %1181 = vmatpush1.bf16.msra.mxu0 0
      %1182 = vmatprep.subr.bf16.mxu0 0
      %1183 = vmatpush1.bf16.msra.mxu0 0
      %1184 = vmatprep.subr.bf16.mxu0 0
      %1185 = vmatpush1.bf16.msra.mxu0 0
      %1186 = vmatprep.subr.bf16.mxu0 0
      %1187 = vmatpush1.bf16.msra.mxu0 0
      %1188 = vmatprep.subr.bf16.mxu0 0
      %1189 = vmatpush1.bf16.msra.mxu0 0
      %1190 = vmatprep.subr.bf16.mxu0 0
      %1191 = vmatpush1.bf16.msra.mxu0 0
      %1192 = vmatprep.subr.bf16.mxu0 0
      %1193 = vmatpush1.bf16.msra.mxu0 0
      %1194 = vmatprep.subr.bf16.mxu0 0
      %1195 = vmatpush1.bf16.msra.mxu0 0
      %1196 = vmatprep.subr.bf16.mxu0 0
      %1197 = vmatpush1.bf16.msra.mxu0 0
      %1198 = vmatprep.subr.bf16.mxu0 0
      %1199 = vmatpush1.bf16.msra.mxu0 0
      %1200 = vmatprep.subr.bf16.mxu0 0
      %1201 = vmatpush1.bf16.msra.mxu0 0
      %1202 = vmatprep.subr.bf16.mxu0 0
      %1203 = vmatpush1.bf16.msra.mxu0 0
      %1204 = vmatprep.subr.bf16.mxu0 0
      %1205 = vmatpush1.bf16.msra.mxu0 0
      %1206 = vmatprep.mubr.bf16.mxu0 0
      %1207 = vmatmul.mubr.bf16.gmra.mrb[0].mxu0 %v1124
      %v1208 = vpop.f32.mrb[0].mxu0
      %v1209 = vadd.f32 0.0, %v1208
      %v1210 = vpop.f32.mrb[0].mxu0
      %v1211 = vpop.f32.mrb[0].mxu0
      %v1212 = vadd.f32 0.0, %v1211
      %v1213 = vpop.f32.mrb[0].mxu0
      %1214 = vmatprep.mubr.bf16.mxu0 0
      %1215 = vmatmul.mubr.bf16.gmra.mrb[0].mxu0 %v1127
      %v1216 = vpop.f32.mrb[0].mxu0
      %v1217 = vadd.f32 0.0, %v1216
      %v1218 = vpop.f32.mrb[0].mxu0
      %v1219 = vpop.f32.mrb[0].mxu0
      %v1220 = vadd.f32 0.0, %v1219
      %v1221 = vpop.f32.mrb[0].mxu0
      %1222 = vmatprep.mubr.bf16.mxu0 0
      %1223 = vmatmul.mubr.bf16.gmra.mrb[0].mxu0 %v1130
      %v1224 = vpop.f32.mrb[0].mxu0
      %v1225 = vadd.f32 0.0, %v1224
      %v1226 = vpop.f32.mrb[0].mxu0
      %v1227 = vpop.f32.mrb[0].mxu0
      %v1228 = vadd.f32 0.0, %v1227
      %v1229 = vpop.f32.mrb[0].mxu0
      %1230 = vmatprep.mubr.bf16.mxu0 0
      %1231 = vmatmul.mubr.bf16.gmra.mrb[0].mxu0 %v1133
      %v1232 = vpop.f32.mrb[0].mxu0
      %v1233 = vadd.f32 0.0, %v1232
      %v1234 = vpop.f32.mrb[0].mxu0
      %v1235 = vpop.f32.mrb[0].mxu0
      %v1236 = vadd.f32 0.0, %v1235
      %v1237 = vpop.f32.mrb[0].mxu0
      %1238 = vmatprep.mubr.bf16.mxu0 0
      %1239 = vmatmul.mubr.bf16.gmra.mrb[0].mxu0 %v1136
      %v1240 = vpop.f32.mrb[0].mxu0
      %v1241 = vadd.f32 0.0, %v1240
      %v1242 = vpop.f32.mrb[0].mxu0
      %v1243 = vpop.f32.mrb[0].mxu0
      %v1244 = vadd.f32 0.0, %v1243
      %v1245 = vpop.f32.mrb[0].mxu0
      %1246 = vmatprep.mubr.bf16.mxu0 0
      %1247 = vmatmul.mubr.bf16.gmra.mrb[0].mxu0 %v1139
      %v1248 = vpop.f32.mrb[0].mxu0
      %v1249 = vadd.f32 0.0, %v1248
      %v1250 = vpop.f32.mrb[0].mxu0
      %v1251 = vpop.f32.mrb[0].mxu0
      %v1252 = vadd.f32 0.0, %v1251
      %v1253 = vpop.f32.mrb[0].mxu0
      %1254 = vmatprep.mubr.bf16.mxu0 0
      %1255 = vmatmul.mubr.bf16.gmra.mrb[0].mxu0 %v1142
      %v1256 = vpop.f32.mrb[0].mxu0
      %v1257 = vadd.f32 0.0, %v1256
      %v1258 = vpop.f32.mrb[0].mxu0
      %v1259 = vpop.f32.mrb[0].mxu0
      %v1260 = vadd.f32 0.0, %v1259
      %v1261 = vpop.f32.mrb[0].mxu0
      %1262 = vmatprep.mubr.bf16.mxu0 0
      %1263 = vmatmul.mubr.bf16.gmra.mrb[0].mxu0 %v1145
      %v1264 = vpop.f32.mrb[0].mxu0
      %v1265 = vadd.f32 0.0, %v1264
      %v1266 = vpop.f32.mrb[0].mxu0
      %v1267 = vpop.f32.mrb[0].mxu0
      %v1268 = vadd.f32 0.0, %v1267
      %v1269 = vpop.f32.mrb[0].mxu0
      %1270 = vmatprep.mubr.bf16.mxu0 0
      %1271 = vmatmul.mubr.bf16.gmra.mrb[0].mxu0 %v1148
      %v1272 = vpop.f32.mrb[0].mxu0
      %v1273 = vadd.f32 0.0, %v1272
      %v1274 = vpop.f32.mrb[0].mxu0
      %v1275 = vpop.f32.mrb[0].mxu0
      %v1276 = vadd.f32 0.0, %v1275
      %v1277 = vpop.f32.mrb[0].mxu0
      %1278 = vmatprep.mubr.bf16.mxu0 0
      %1279 = vmatmul.mubr.bf16.gmra.mrb[0].mxu0 %v1151
      %v1280 = vpop.f32.mrb[0].mxu0
      %v1281 = vadd.f32 0.0, %v1280
      %v1282 = vpop.f32.mrb[0].mxu0
      %v1283 = vpop.f32.mrb[0].mxu0
      %v1284 = vadd.f32 0.0, %v1283
      %v1285 = vpop.f32.mrb[0].mxu0
      %1286 = vmatprep.mubr.bf16.mxu0 0
      %1287 = vmatmul.mubr.bf16.gmra.mrb[0].mxu0 %v1154
      %v1288 = vpop.f32.mrb[0].mxu0
      %v1289 = vadd.f32 0.0, %v1288
      %v1290 = vpop.f32.mrb[0].mxu0
      %v1291 = vpop.f32.mrb[0].mxu0
      %v1292 = vadd.f32 0.0, %v1291
      %v1293 = vpop.f32.mrb[0].mxu0
      %1294 = vmatprep.mubr.bf16.mxu0 0
      %1295 = vmatmul.mubr.bf16.gmra.mrb[0].mxu0 %v1157
      %v1296 = vpop.f32.mrb[0].mxu0
      %v1297 = vadd.f32 0.0, %v1296
      %v1298 = vpop.f32.mrb[0].mxu0
      %v1299 = vpop.f32.mrb[0].mxu0
      %v1300 = vadd.f32 0.0, %v1299
      %v1301 = vpop.f32.mrb[0].mxu0
      %1302 = vmatprep.mubr.bf16.mxu0 0
      %1303 = vmatmul.mubr.bf16.gmra.mrb[0].mxu0 %v1160
      %v1304 = vpop.f32.mrb[0].mxu0
      %v1305 = vadd.f32 0.0, %v1304
      %v1306 = vpop.f32.mrb[0].mxu0
      %v1307 = vpop.f32.mrb[0].mxu0
      %v1308 = vadd.f32 0.0, %v1307
      %v1309 = vpop.f32.mrb[0].mxu0
      %1310 = vmatprep.mubr.bf16.mxu0 0
      %1311 = vmatmul.mubr.bf16.gmra.mrb[0].mxu0 %v1163
      %v1312 = vpop.f32.mrb[0].mxu0
      %v1313 = vadd.f32 0.0, %v1312
      %v1314 = vpop.f32.mrb[0].mxu0
      %v1315 = vpop.f32.mrb[0].mxu0
      %v1316 = vadd.f32 0.0, %v1315
      %v1317 = vpop.f32.mrb[0].mxu0
      %1318 = vmatprep.mubr.bf16.mxu0 0
      %1319 = vmatmul.mubr.bf16.gmra.mrb[0].mxu0 %v1166
      %v1320 = vpop.f32.mrb[0].mxu0
      %v1321 = vadd.f32 0.0, %v1320
      %v1322 = vpop.f32.mrb[0].mxu0
      %v1323 = vpop.f32.mrb[0].mxu0
      %v1324 = vadd.f32 0.0, %v1323
      %v1325 = vpop.f32.mrb[0].mxu0
      %1326 = vmatprep.mubr.bf16.mxu0 0
      %1327 = vmatmul.mubr.bf16.gmra.mrb[0].mxu0 %v1169
      %v1328 = vpop.f32.mrb[0].mxu0
      %v1329 = vadd.f32 0.0, %v1328
      %v1330 = vpop.f32.mrb[0].mxu0
      %v1331 = vpop.f32.mrb[0].mxu0
      %v1332 = vadd.f32 0.0, %v1331
      %v1333 = vpop.f32.mrb[0].mxu0
      %1334 = vdwg.mxu0
      %v1335 = vadd.f32 %v914, %v1209
      %v1336 = vadd.f32 %v917, %v1212
      %v1337 = vadd.f32 %v922, %v1217
      %v1338 = vadd.f32 %v925, %v1220
      %v1339 = vadd.f32 %v930, %v1225
      %v1340 = vadd.f32 %v933, %v1228
      %v1341 = vadd.f32 %v938, %v1233
      %v1342 = vadd.f32 %v941, %v1236
      %v1343 = vadd.f32 %v946, %v1241
      %v1344 = vadd.f32 %v949, %v1244
      %v1345 = vadd.f32 %v954, %v1249
      %v1346 = vadd.f32 %v957, %v1252
      %v1347 = vadd.f32 %v962, %v1257
      %v1348 = vadd.f32 %v965, %v1260
      %v1349 = vadd.f32 %v970, %v1265
      %v1350 = vadd.f32 %v973, %v1268
      %v1351 = vadd.f32 %v978, %v1273
      %v1352 = vadd.f32 %v981, %v1276
      %v1353 = vadd.f32 %v986, %v1281
      %v1354 = vadd.f32 %v989, %v1284
      %v1355 = vadd.f32 %v994, %v1289
      %v1356 = vadd.f32 %v997, %v1292
      %v1357 = vadd.f32 %v1002, %v1297
      %v1358 = vadd.f32 %v1005, %v1300
      %v1359 = vadd.f32 %v1010, %v1305
      %v1360 = vadd.f32 %v1013, %v1308
      %v1361 = vadd.f32 %v1018, %v1313
      %v1362 = vadd.f32 %v1021, %v1316
      %v1363 = vadd.f32 %v1026, %v1321
      %v1364 = vadd.f32 %v1029, %v1324
      %v1365 = vadd.f32 %v1034, %v1329
      %v1366 = vadd.f32 %v1037, %v1332
      %v1367 = vpack.c.bf16 %v1336, %v1335
      %v1368 = vpack.c.bf16 %v1338, %v1337
      %v1369 = vpack.c.bf16 %v1340, %v1339
      %v1370 = vpack.c.bf16 %v1342, %v1341
      %v1371 = vpack.c.bf16 %v1344, %v1343
      %v1372 = vpack.c.bf16 %v1346, %v1345
      %v1373 = vpack.c.bf16 %v1348, %v1347
      %v1374 = vpack.c.bf16 %v1350, %v1349
      %v1375 = vpack.c.bf16 %v1352, %v1351
      %v1376 = vpack.c.bf16 %v1354, %v1353
      %v1377 = vpack.c.bf16 %v1356, %v1355
      %v1378 = vpack.c.bf16 %v1358, %v1357
      %v1379 = vpack.c.bf16 %v1360, %v1359
      %v1380 = vpack.c.bf16 %v1362, %v1361
      %v1381 = vpack.c.bf16 %v1364, %v1363
      %v1382 = vpack.c.bf16 %v1366, %v1365
      %v1383 = vld [vmem:[%s2] sm:$0xf]
      %s1384 = scalar_lea.vmem %s2, 4
      %v1385 = vld [vmem:[%s1384] sm:$0xf]
      %vm1386 = vcmask 64512
      %v1388 = vsel %vm1386, %v1367, 0
      %v1391 = vsel %vm1386, %v1368, 0
      %v1394 = vsel %vm1386, %v1369, 0
      %v1397 = vsel %vm1386, %v1370, 0
      %v1400 = vsel %vm1386, %v1371, 0
      %v1403 = vsel %vm1386, %v1372, 0
      %v1406 = vsel %vm1386, %v1373, 0
      %v1409 = vsel %vm1386, %v1374, 0
      %v1412 = vsel %vm1386, %v1375, 0
      %v1415 = vsel %vm1386, %v1376, 0
      %v1418 = vsel %vm1386, %v1377, 0
      %v1421 = vsel %vm1386, %v1378, 0
      %v1424 = vsel %vm1386, %v1379, 0
      %v1427 = vsel %vm1386, %v1380, 0
      %v1430 = vsel %vm1386, %v1381, 0
      %v1433 = vsel %vm1386, %v1382, 0
      %vm1435 = vcmask 1043456
      %v1437 = vsel %vm1435, %v1385, 0
      %1439 = vmatprep.subr.bf16.mxu0 0
      %1440 = vmatpush1.bf16.msra.mxu0 %v1437
      %1441 = vmatprep.subr.bf16.mxu0 0
      %1442 = vmatpush1.bf16.msra.mxu0 0
      %1443 = vmatprep.subr.bf16.mxu0 0
      %1444 = vmatpush1.bf16.msra.mxu0 0
      %1445 = vmatprep.subr.bf16.mxu0 0
      %1446 = vmatpush1.bf16.msra.mxu0 0
      %1447 = vmatprep.subr.bf16.mxu0 0
      %1448 = vmatpush1.bf16.msra.mxu0 0
      %1449 = vmatprep.subr.bf16.mxu0 0
      %1450 = vmatpush1.bf16.msra.mxu0 0
      %1451 = vmatprep.subr.bf16.mxu0 0
      %1452 = vmatpush1.bf16.msra.mxu0 0
      %1453 = vmatprep.subr.bf16.mxu0 0
      %1454 = vmatpush1.bf16.msra.mxu0 0
      %1455 = vmatprep.subr.bf16.mxu0 0
      %1456 = vmatpush1.bf16.msra.mxu0 0
      %1457 = vmatprep.subr.bf16.mxu0 0
      %1458 = vmatpush1.bf16.msra.mxu0 0
      %1459 = vmatprep.subr.bf16.mxu0 0
      %1460 = vmatpush1.bf16.msra.mxu0 0
      %1461 = vmatprep.subr.bf16.mxu0 0
      %1462 = vmatpush1.bf16.msra.mxu0 0
      %1463 = vmatprep.subr.bf16.mxu0 0
      %1464 = vmatpush1.bf16.msra.mxu0 0
      %1465 = vmatprep.subr.bf16.mxu0 0
      %1466 = vmatpush1.bf16.msra.mxu0 0
      %1467 = vmatprep.subr.bf16.mxu0 0
      %1468 = vmatpush1.bf16.msra.mxu0 0
      %1469 = vmatprep.subr.bf16.mxu0 0
      %1470 = vmatpush1.bf16.msra.mxu0 0
      %1471 = vmatprep.mubr.bf16.mxu0 0
      %1472 = vmatmul.mubr.bf16.gmra.mrb[0].mxu0 %v1388
      %v1473 = vpop.f32.mrb[0].mxu0
      %v1474 = vadd.f32 0.0, %v1473
      %v1475 = vpop.f32.mrb[0].mxu0
      %v1476 = vpop.f32.mrb[0].mxu0
      %v1477 = vadd.f32 0.0, %v1476
      %v1478 = vpop.f32.mrb[0].mxu0
      %1479 = vmatprep.mubr.bf16.mxu0 0
      %1480 = vmatmul.mubr.bf16.gmra.mrb[0].mxu0 %v1391
      %v1481 = vpop.f32.mrb[0].mxu0
      %v1482 = vadd.f32 0.0, %v1481
      %v1483 = vpop.f32.mrb[0].mxu0
      %v1484 = vpop.f32.mrb[0].mxu0
      %v1485 = vadd.f32 0.0, %v1484
      %v1486 = vpop.f32.mrb[0].mxu0
      %1487 = vmatprep.mubr.bf16.mxu0 0
      %1488 = vmatmul.mubr.bf16.gmra.mrb[0].mxu0 %v1394
      %v1489 = vpop.f32.mrb[0].mxu0
      %v1490 = vadd.f32 0.0, %v1489
      %v1491 = vpop.f32.mrb[0].mxu0
      %v1492 = vpop.f32.mrb[0].mxu0
      %v1493 = vadd.f32 0.0, %v1492
      %v1494 = vpop.f32.mrb[0].mxu0
      %1495 = vmatprep.mubr.bf16.mxu0 0
      %1496 = vmatmul.mubr.bf16.gmra.mrb[0].mxu0 %v1397
      %v1497 = vpop.f32.mrb[0].mxu0
      %v1498 = vadd.f32 0.0, %v1497
      %v1499 = vpop.f32.mrb[0].mxu0
      %v1500 = vpop.f32.mrb[0].mxu0
      %v1501 = vadd.f32 0.0, %v1500
      %v1502 = vpop.f32.mrb[0].mxu0
      %1503 = vmatprep.mubr.bf16.mxu0 0
      %1504 = vmatmul.mubr.bf16.gmra.mrb[0].mxu0 %v1400
      %v1505 = vpop.f32.mrb[0].mxu0
      %v1506 = vadd.f32 0.0, %v1505
      %v1507 = vpop.f32.mrb[0].mxu0
      %v1508 = vpop.f32.mrb[0].mxu0
      %v1509 = vadd.f32 0.0, %v1508
      %v1510 = vpop.f32.mrb[0].mxu0
      %1511 = vmatprep.mubr.bf16.mxu0 0
      %1512 = vmatmul.mubr.bf16.gmra.mrb[0].mxu0 %v1403
      %v1513 = vpop.f32.mrb[0].mxu0
      %v1514 = vadd.f32 0.0, %v1513
      %v1515 = vpop.f32.mrb[0].mxu0
      %v1516 = vpop.f32.mrb[0].mxu0
      %v1517 = vadd.f32 0.0, %v1516
      %v1518 = vpop.f32.mrb[0].mxu0
      %1519 = vmatprep.mubr.bf16.mxu0 0
      %1520 = vmatmul.mubr.bf16.gmra.mrb[0].mxu0 %v1406
      %v1521 = vpop.f32.mrb[0].mxu0
      %v1522 = vadd.f32 0.0, %v1521
      %v1523 = vpop.f32.mrb[0].mxu0
      %v1524 = vpop.f32.mrb[0].mxu0
      %v1525 = vadd.f32 0.0, %v1524
      %v1526 = vpop.f32.mrb[0].mxu0
      %1527 = vmatprep.mubr.bf16.mxu0 0
      %1528 = vmatmul.mubr.bf16.gmra.mrb[0].mxu0 %v1409
      %v1529 = vpop.f32.mrb[0].mxu0
      %v1530 = vadd.f32 0.0, %v1529
      %v1531 = vpop.f32.mrb[0].mxu0
      %v1532 = vpop.f32.mrb[0].mxu0
      %v1533 = vadd.f32 0.0, %v1532
      %v1534 = vpop.f32.mrb[0].mxu0
      %1535 = vmatprep.mubr.bf16.mxu0 0
      %1536 = vmatmul.mubr.bf16.gmra.mrb[0].mxu0 %v1412
      %v1537 = vpop.f32.mrb[0].mxu0
      %v1538 = vadd.f32 0.0, %v1537
      %v1539 = vpop.f32.mrb[0].mxu0
      %v1540 = vpop.f32.mrb[0].mxu0
      %v1541 = vadd.f32 0.0, %v1540
      %v1542 = vpop.f32.mrb[0].mxu0
      %1543 = vmatprep.mubr.bf16.mxu0 0
      %1544 = vmatmul.mubr.bf16.gmra.mrb[0].mxu0 %v1415
      %v1545 = vpop.f32.mrb[0].mxu0
      %v1546 = vadd.f32 0.0, %v1545
      %v1547 = vpop.f32.mrb[0].mxu0
      %v1548 = vpop.f32.mrb[0].mxu0
      %v1549 = vadd.f32 0.0, %v1548
      %v1550 = vpop.f32.mrb[0].mxu0
      %1551 = vmatprep.mubr.bf16.mxu0 0
      %1552 = vmatmul.mubr.bf16.gmra.mrb[0].mxu0 %v1418
      %v1553 = vpop.f32.mrb[0].mxu0
      %v1554 = vadd.f32 0.0, %v1553
      %v1555 = vpop.f32.mrb[0].mxu0
      %v1556 = vpop.f32.mrb[0].mxu0
      %v1557 = vadd.f32 0.0, %v1556
      %v1558 = vpop.f32.mrb[0].mxu0
      %1559 = vmatprep.mubr.bf16.mxu0 0
      %1560 = vmatmul.mubr.bf16.gmra.mrb[0].mxu0 %v1421
      %v1561 = vpop.f32.mrb[0].mxu0
      %v1562 = vadd.f32 0.0, %v1561
      %v1563 = vpop.f32.mrb[0].mxu0
      %v1564 = vpop.f32.mrb[0].mxu0
      %v1565 = vadd.f32 0.0, %v1564
      %v1566 = vpop.f32.mrb[0].mxu0
      %1567 = vmatprep.mubr.bf16.mxu0 0
      %1568 = vmatmul.mubr.bf16.gmra.mrb[0].mxu0 %v1424
      %v1569 = vpop.f32.mrb[0].mxu0
      %v1570 = vadd.f32 0.0, %v1569
      %v1571 = vpop.f32.mrb[0].mxu0
      %v1572 = vpop.f32.mrb[0].mxu0
      %v1573 = vadd.f32 0.0, %v1572
      %v1574 = vpop.f32.mrb[0].mxu0
      %1575 = vmatprep.mubr.bf16.mxu0 0
      %1576 = vmatmul.mubr.bf16.gmra.mrb[0].mxu0 %v1427
      %v1577 = vpop.f32.mrb[0].mxu0
      %v1578 = vadd.f32 0.0, %v1577
      %v1579 = vpop.f32.mrb[0].mxu0
      %v1580 = vpop.f32.mrb[0].mxu0
      %v1581 = vadd.f32 0.0, %v1580
      %v1582 = vpop.f32.mrb[0].mxu0
      %1583 = vmatprep.mubr.bf16.mxu0 0
      %1584 = vmatmul.mubr.bf16.gmra.mrb[0].mxu0 %v1430
      %v1585 = vpop.f32.mrb[0].mxu0
      %v1586 = vadd.f32 0.0, %v1585
      %v1587 = vpop.f32.mrb[0].mxu0
      %v1588 = vpop.f32.mrb[0].mxu0
      %v1589 = vadd.f32 0.0, %v1588
      %v1590 = vpop.f32.mrb[0].mxu0
      %1591 = vmatprep.mubr.bf16.mxu0 0
      %1592 = vmatmul.mubr.bf16.gmra.mrb[0].mxu0 %v1433
      %v1593 = vpop.f32.mrb[0].mxu0
      %v1594 = vadd.f32 0.0, %v1593
      %v1595 = vpop.f32.mrb[0].mxu0
      %v1596 = vpop.f32.mrb[0].mxu0
      %v1597 = vadd.f32 0.0, %v1596
      %v1598 = vpop.f32.mrb[0].mxu0
      %1599 = vdwg.mxu0
      %v1601 = vsel %vm1386, 0, 0
      %v1604 = vsel %vm1435, %v1383, 0
      %1606 = vmatprep.subr.bf16.mxu0 0
      %1607 = vmatpush1.bf16.msra.mxu0 %v1604
      %1608 = vmatprep.subr.bf16.mxu0 0
      %1609 = vmatpush1.bf16.msra.mxu0 0
      %1610 = vmatprep.subr.bf16.mxu0 0
      %1611 = vmatpush1.bf16.msra.mxu0 0
      %1612 = vmatprep.subr.bf16.mxu0 0
      %1613 = vmatpush1.bf16.msra.mxu0 0
      %1614 = vmatprep.subr.bf16.mxu0 0
      %1615 = vmatpush1.bf16.msra.mxu0 0
      %1616 = vmatprep.subr.bf16.mxu0 0
      %1617 = vmatpush1.bf16.msra.mxu0 0
      %1618 = vmatprep.subr.bf16.mxu0 0
      %1619 = vmatpush1.bf16.msra.mxu0 0
      %1620 = vmatprep.subr.bf16.mxu0 0
      %1621 = vmatpush1.bf16.msra.mxu0 0
      %1622 = vmatprep.subr.bf16.mxu0 0
      %1623 = vmatpush1.bf16.msra.mxu0 0
      %1624 = vmatprep.subr.bf16.mxu0 0
      %1625 = vmatpush1.bf16.msra.mxu0 0
      %1626 = vmatprep.subr.bf16.mxu0 0
      %1627 = vmatpush1.bf16.msra.mxu0 0
      %1628 = vmatprep.subr.bf16.mxu0 0
      %1629 = vmatpush1.bf16.msra.mxu0 0
      %1630 = vmatprep.subr.bf16.mxu0 0
      %1631 = vmatpush1.bf16.msra.mxu0 0
      %1632 = vmatprep.subr.bf16.mxu0 0
      %1633 = vmatpush1.bf16.msra.mxu0 0
      %1634 = vmatprep.subr.bf16.mxu0 0
      %1635 = vmatpush1.bf16.msra.mxu0 0
      %1636 = vmatprep.subr.bf16.mxu0 0
      %1637 = vmatpush1.bf16.msra.mxu0 0
      %1638 = vmatprep.mubr.bf16.mxu0 0
      %1639 = vmatmul.mubr.bf16.gmra.mrb[0].mxu0 %v1601
      %v1640 = vpop.f32.mrb[0].mxu0
      %v1641 = vadd.f32 %v1474, %v1640
      %v1642 = vpop.f32.mrb[0].mxu0
      %v1643 = vpop.f32.mrb[0].mxu0
      %v1644 = vadd.f32 %v1477, %v1643
      %v1645 = vpop.f32.mrb[0].mxu0
      %1646 = vmatprep.mubr.bf16.mxu0 0
      %1647 = vmatmul.mubr.bf16.gmra.mrb[0].mxu0 %v1388
      %v1648 = vpop.f32.mrb[0].mxu0
      %v1649 = vadd.f32 %v1482, %v1648
      %v1650 = vpop.f32.mrb[0].mxu0
      %v1651 = vpop.f32.mrb[0].mxu0
      %v1652 = vadd.f32 %v1485, %v1651
      %v1653 = vpop.f32.mrb[0].mxu0
      %1654 = vmatprep.mubr.bf16.mxu0 0
      %1655 = vmatmul.mubr.bf16.gmra.mrb[0].mxu0 %v1391
      %v1656 = vpop.f32.mrb[0].mxu0
      %v1657 = vadd.f32 %v1490, %v1656
      %v1658 = vpop.f32.mrb[0].mxu0
      %v1659 = vpop.f32.mrb[0].mxu0
      %v1660 = vadd.f32 %v1493, %v1659
      %v1661 = vpop.f32.mrb[0].mxu0
      %1662 = vmatprep.mubr.bf16.mxu0 0
      %1663 = vmatmul.mubr.bf16.gmra.mrb[0].mxu0 %v1394
      %v1664 = vpop.f32.mrb[0].mxu0
      %v1665 = vadd.f32 %v1498, %v1664
      %v1666 = vpop.f32.mrb[0].mxu0
      %v1667 = vpop.f32.mrb[0].mxu0
      %v1668 = vadd.f32 %v1501, %v1667
      %v1669 = vpop.f32.mrb[0].mxu0
      %1670 = vmatprep.mubr.bf16.mxu0 0
      %1671 = vmatmul.mubr.bf16.gmra.mrb[0].mxu0 %v1397
      %v1672 = vpop.f32.mrb[0].mxu0
      %v1673 = vadd.f32 %v1506, %v1672
      %v1674 = vpop.f32.mrb[0].mxu0
      %v1675 = vpop.f32.mrb[0].mxu0
      %v1676 = vadd.f32 %v1509, %v1675
      %v1677 = vpop.f32.mrb[0].mxu0
      %1678 = vmatprep.mubr.bf16.mxu0 0
      %1679 = vmatmul.mubr.bf16.gmra.mrb[0].mxu0 %v1400
      %v1680 = vpop.f32.mrb[0].mxu0
      %v1681 = vadd.f32 %v1514, %v1680
      %v1682 = vpop.f32.mrb[0].mxu0
      %v1683 = vpop.f32.mrb[0].mxu0
      %v1684 = vadd.f32 %v1517, %v1683
      %v1685 = vpop.f32.mrb[0].mxu0
      %1686 = vmatprep.mubr.bf16.mxu0 0
      %1687 = vmatmul.mubr.bf16.gmra.mrb[0].mxu0 %v1403
      %v1688 = vpop.f32.mrb[0].mxu0
      %v1689 = vadd.f32 %v1522, %v1688
      %v1690 = vpop.f32.mrb[0].mxu0
      %v1691 = vpop.f32.mrb[0].mxu0
      %v1692 = vadd.f32 %v1525, %v1691
      %v1693 = vpop.f32.mrb[0].mxu0
      %1694 = vmatprep.mubr.bf16.mxu0 0
      %1695 = vmatmul.mubr.bf16.gmra.mrb[0].mxu0 %v1406
      %v1696 = vpop.f32.mrb[0].mxu0
      %v1697 = vadd.f32 %v1530, %v1696
      %v1698 = vpop.f32.mrb[0].mxu0
      %v1699 = vpop.f32.mrb[0].mxu0
      %v1700 = vadd.f32 %v1533, %v1699
      %v1701 = vpop.f32.mrb[0].mxu0
      %1702 = vmatprep.mubr.bf16.mxu0 0
      %1703 = vmatmul.mubr.bf16.gmra.mrb[0].mxu0 %v1409
      %v1704 = vpop.f32.mrb[0].mxu0
      %v1705 = vadd.f32 %v1538, %v1704
      %v1706 = vpop.f32.mrb[0].mxu0
      %v1707 = vpop.f32.mrb[0].mxu0
      %v1708 = vadd.f32 %v1541, %v1707
      %v1709 = vpop.f32.mrb[0].mxu0
      %1710 = vmatprep.mubr.bf16.mxu0 0
      %1711 = vmatmul.mubr.bf16.gmra.mrb[0].mxu0 %v1412
      %v1712 = vpop.f32.mrb[0].mxu0
      %v1713 = vadd.f32 %v1546, %v1712
      %v1714 = vpop.f32.mrb[0].mxu0
      %v1715 = vpop.f32.mrb[0].mxu0
      %v1716 = vadd.f32 %v1549, %v1715
      %v1717 = vpop.f32.mrb[0].mxu0
      %1718 = vmatprep.mubr.bf16.mxu0 0
      %1719 = vmatmul.mubr.bf16.gmra.mrb[0].mxu0 %v1415
      %v1720 = vpop.f32.mrb[0].mxu0
      %v1721 = vadd.f32 %v1554, %v1720
      %v1722 = vpop.f32.mrb[0].mxu0
      %v1723 = vpop.f32.mrb[0].mxu0
      %v1724 = vadd.f32 %v1557, %v1723
      %v1725 = vpop.f32.mrb[0].mxu0
      %1726 = vmatprep.mubr.bf16.mxu0 0
      %1727 = vmatmul.mubr.bf16.gmra.mrb[0].mxu0 %v1418
      %v1728 = vpop.f32.mrb[0].mxu0
      %v1729 = vadd.f32 %v1562, %v1728
      %v1730 = vpop.f32.mrb[0].mxu0
      %v1731 = vpop.f32.mrb[0].mxu0
      %v1732 = vadd.f32 %v1565, %v1731
      %v1733 = vpop.f32.mrb[0].mxu0
      %1734 = vmatprep.mubr.bf16.mxu0 0
      %1735 = vmatmul.mubr.bf16.gmra.mrb[0].mxu0 %v1421
      %v1736 = vpop.f32.mrb[0].mxu0
      %v1737 = vadd.f32 %v1570, %v1736
      %v1738 = vpop.f32.mrb[0].mxu0
      %v1739 = vpop.f32.mrb[0].mxu0
      %v1740 = vadd.f32 %v1573, %v1739
      %v1741 = vpop.f32.mrb[0].mxu0
      %1742 = vmatprep.mubr.bf16.mxu0 0
      %1743 = vmatmul.mubr.bf16.gmra.mrb[0].mxu0 %v1424
      %v1744 = vpop.f32.mrb[0].mxu0
      %v1745 = vadd.f32 %v1578, %v1744
      %v1746 = vpop.f32.mrb[0].mxu0
      %v1747 = vpop.f32.mrb[0].mxu0
      %v1748 = vadd.f32 %v1581, %v1747
      %v1749 = vpop.f32.mrb[0].mxu0
      %1750 = vmatprep.mubr.bf16.mxu0 0
      %1751 = vmatmul.mubr.bf16.gmra.mrb[0].mxu0 %v1427
      %v1752 = vpop.f32.mrb[0].mxu0
      %v1753 = vadd.f32 %v1586, %v1752
      %v1754 = vpop.f32.mrb[0].mxu0
      %v1755 = vpop.f32.mrb[0].mxu0
      %v1756 = vadd.f32 %v1589, %v1755
      %v1757 = vpop.f32.mrb[0].mxu0
      %1758 = vmatprep.mubr.bf16.mxu0 0
      %1759 = vmatmul.mubr.bf16.gmra.mrb[0].mxu0 %v1430
      %v1760 = vpop.f32.mrb[0].mxu0
      %v1761 = vadd.f32 %v1594, %v1760
      %v1762 = vpop.f32.mrb[0].mxu0
      %v1763 = vpop.f32.mrb[0].mxu0
      %v1764 = vadd.f32 %v1597, %v1763
      %v1765 = vpop.f32.mrb[0].mxu0
      %1766 = vdwg.mxu0
      %s1767 = scalar_lea.vmem %s2, 8
      %v1768 = vld [vmem:[%s1767] sm:$0xf]
      %v1770 = vsel %vm1435, %v1768, 0
      %1772 = vmatprep.subr.bf16.mxu0 0
      %1773 = vmatpush1.bf16.msra.mxu0 %v1770
      %1774 = vmatprep.subr.bf16.mxu0 0
      %1775 = vmatpush1.bf16.msra.mxu0 0
      %1776 = vmatprep.subr.bf16.mxu0 0
      %1777 = vmatpush1.bf16.msra.mxu0 0
      %1778 = vmatprep.subr.bf16.mxu0 0
      %1779 = vmatpush1.bf16.msra.mxu0 0
      %1780 = vmatprep.subr.bf16.mxu0 0
      %1781 = vmatpush1.bf16.msra.mxu0 0
      %1782 = vmatprep.subr.bf16.mxu0 0
      %1783 = vmatpush1.bf16.msra.mxu0 0
      %1784 = vmatprep.subr.bf16.mxu0 0
      %1785 = vmatpush1.bf16.msra.mxu0 0
      %1786 = vmatprep.subr.bf16.mxu0 0
      %1787 = vmatpush1.bf16.msra.mxu0 0
      %1788 = vmatprep.subr.bf16.mxu0 0
      %1789 = vmatpush1.bf16.msra.mxu0 0
      %1790 = vmatprep.subr.bf16.mxu0 0
      %1791 = vmatpush1.bf16.msra.mxu0 0
      %1792 = vmatprep.subr.bf16.mxu0 0
      %1793 = vmatpush1.bf16.msra.mxu0 0
      %1794 = vmatprep.subr.bf16.mxu0 0
      %1795 = vmatpush1.bf16.msra.mxu0 0
      %1796 = vmatprep.subr.bf16.mxu0 0
      %1797 = vmatpush1.bf16.msra.mxu0 0
      %1798 = vmatprep.subr.bf16.mxu0 0
      %1799 = vmatpush1.bf16.msra.mxu0 0
      %1800 = vmatprep.subr.bf16.mxu0 0
      %1801 = vmatpush1.bf16.msra.mxu0 0
      %1802 = vmatprep.subr.bf16.mxu0 0
      %1803 = vmatpush1.bf16.msra.mxu0 0
      %1804 = vmatprep.mubr.bf16.mxu0 0
      %1805 = vmatmul.mubr.bf16.gmra.mrb[0].mxu0 %v1391
      %v1806 = vpop.f32.mrb[0].mxu0
      %v1807 = vadd.f32 0.0, %v1806
      %v1808 = vpop.f32.mrb[0].mxu0
      %v1809 = vpop.f32.mrb[0].mxu0
      %v1810 = vadd.f32 0.0, %v1809
      %v1811 = vpop.f32.mrb[0].mxu0
      %1812 = vmatprep.mubr.bf16.mxu0 0
      %1813 = vmatmul.mubr.bf16.gmra.mrb[0].mxu0 %v1394
      %v1814 = vpop.f32.mrb[0].mxu0
      %v1815 = vadd.f32 0.0, %v1814
      %v1816 = vpop.f32.mrb[0].mxu0
      %v1817 = vpop.f32.mrb[0].mxu0
      %v1818 = vadd.f32 0.0, %v1817
      %v1819 = vpop.f32.mrb[0].mxu0
      %1820 = vmatprep.mubr.bf16.mxu0 0
      %1821 = vmatmul.mubr.bf16.gmra.mrb[0].mxu0 %v1397
      %v1822 = vpop.f32.mrb[0].mxu0
      %v1823 = vadd.f32 0.0, %v1822
      %v1824 = vpop.f32.mrb[0].mxu0
      %v1825 = vpop.f32.mrb[0].mxu0
      %v1826 = vadd.f32 0.0, %v1825
      %v1827 = vpop.f32.mrb[0].mxu0
      %1828 = vmatprep.mubr.bf16.mxu0 0
      %1829 = vmatmul.mubr.bf16.gmra.mrb[0].mxu0 %v1400
      %v1830 = vpop.f32.mrb[0].mxu0
      %v1831 = vadd.f32 0.0, %v1830
      %v1832 = vpop.f32.mrb[0].mxu0
      %v1833 = vpop.f32.mrb[0].mxu0
      %v1834 = vadd.f32 0.0, %v1833
      %v1835 = vpop.f32.mrb[0].mxu0
      %1836 = vmatprep.mubr.bf16.mxu0 0
      %1837 = vmatmul.mubr.bf16.gmra.mrb[0].mxu0 %v1403
      %v1838 = vpop.f32.mrb[0].mxu0
      %v1839 = vadd.f32 0.0, %v1838
      %v1840 = vpop.f32.mrb[0].mxu0
      %v1841 = vpop.f32.mrb[0].mxu0
      %v1842 = vadd.f32 0.0, %v1841
      %v1843 = vpop.f32.mrb[0].mxu0
      %1844 = vmatprep.mubr.bf16.mxu0 0
      %1845 = vmatmul.mubr.bf16.gmra.mrb[0].mxu0 %v1406
      %v1846 = vpop.f32.mrb[0].mxu0
      %v1847 = vadd.f32 0.0, %v1846
      %v1848 = vpop.f32.mrb[0].mxu0
      %v1849 = vpop.f32.mrb[0].mxu0
      %v1850 = vadd.f32 0.0, %v1849
      %v1851 = vpop.f32.mrb[0].mxu0
      %1852 = vmatprep.mubr.bf16.mxu0 0
      %1853 = vmatmul.mubr.bf16.gmra.mrb[0].mxu0 %v1409
      %v1854 = vpop.f32.mrb[0].mxu0
      %v1855 = vadd.f32 0.0, %v1854
      %v1856 = vpop.f32.mrb[0].mxu0
      %v1857 = vpop.f32.mrb[0].mxu0
      %v1858 = vadd.f32 0.0, %v1857
      %v1859 = vpop.f32.mrb[0].mxu0
      %1860 = vmatprep.mubr.bf16.mxu0 0
      %1861 = vmatmul.mubr.bf16.gmra.mrb[0].mxu0 %v1412
      %v1862 = vpop.f32.mrb[0].mxu0
      %v1863 = vadd.f32 0.0, %v1862
      %v1864 = vpop.f32.mrb[0].mxu0
      %v1865 = vpop.f32.mrb[0].mxu0
      %v1866 = vadd.f32 0.0, %v1865
      %v1867 = vpop.f32.mrb[0].mxu0
      %1868 = vmatprep.mubr.bf16.mxu0 0
      %1869 = vmatmul.mubr.bf16.gmra.mrb[0].mxu0 %v1415
      %v1870 = vpop.f32.mrb[0].mxu0
      %v1871 = vadd.f32 0.0, %v1870
      %v1872 = vpop.f32.mrb[0].mxu0
      %v1873 = vpop.f32.mrb[0].mxu0
      %v1874 = vadd.f32 0.0, %v1873
      %v1875 = vpop.f32.mrb[0].mxu0
      %1876 = vmatprep.mubr.bf16.mxu0 0
      %1877 = vmatmul.mubr.bf16.gmra.mrb[0].mxu0 %v1418
      %v1878 = vpop.f32.mrb[0].mxu0
      %v1879 = vadd.f32 0.0, %v1878
      %v1880 = vpop.f32.mrb[0].mxu0
      %v1881 = vpop.f32.mrb[0].mxu0
      %v1882 = vadd.f32 0.0, %v1881
      %v1883 = vpop.f32.mrb[0].mxu0
      %1884 = vmatprep.mubr.bf16.mxu0 0
      %1885 = vmatmul.mubr.bf16.gmra.mrb[0].mxu0 %v1421
      %v1886 = vpop.f32.mrb[0].mxu0
      %v1887 = vadd.f32 0.0, %v1886
      %v1888 = vpop.f32.mrb[0].mxu0
      %v1889 = vpop.f32.mrb[0].mxu0
      %v1890 = vadd.f32 0.0, %v1889
      %v1891 = vpop.f32.mrb[0].mxu0
      %1892 = vmatprep.mubr.bf16.mxu0 0
      %1893 = vmatmul.mubr.bf16.gmra.mrb[0].mxu0 %v1424
      %v1894 = vpop.f32.mrb[0].mxu0
      %v1895 = vadd.f32 0.0, %v1894
      %v1896 = vpop.f32.mrb[0].mxu0
      %v1897 = vpop.f32.mrb[0].mxu0
      %v1898 = vadd.f32 0.0, %v1897
      %v1899 = vpop.f32.mrb[0].mxu0
      %1900 = vmatprep.mubr.bf16.mxu0 0
      %1901 = vmatmul.mubr.bf16.gmra.mrb[0].mxu0 %v1427
      %v1902 = vpop.f32.mrb[0].mxu0
      %v1903 = vadd.f32 0.0, %v1902
      %v1904 = vpop.f32.mrb[0].mxu0
      %v1905 = vpop.f32.mrb[0].mxu0
      %v1906 = vadd.f32 0.0, %v1905
      %v1907 = vpop.f32.mrb[0].mxu0
      %1908 = vmatprep.mubr.bf16.mxu0 0
      %1909 = vmatmul.mubr.bf16.gmra.mrb[0].mxu0 %v1430
      %v1910 = vpop.f32.mrb[0].mxu0
      %v1911 = vadd.f32 0.0, %v1910
      %v1912 = vpop.f32.mrb[0].mxu0
      %v1913 = vpop.f32.mrb[0].mxu0
      %v1914 = vadd.f32 0.0, %v1913
      %v1915 = vpop.f32.mrb[0].mxu0
      %1916 = vmatprep.mubr.bf16.mxu0 0
      %1917 = vmatmul.mubr.bf16.gmra.mrb[0].mxu0 %v1433
      %v1918 = vpop.f32.mrb[0].mxu0
      %v1919 = vadd.f32 0.0, %v1918
      %v1920 = vpop.f32.mrb[0].mxu0
      %v1921 = vpop.f32.mrb[0].mxu0
      %v1922 = vadd.f32 0.0, %v1921
      %v1923 = vpop.f32.mrb[0].mxu0
      %1924 = vmatprep.mubr.bf16.mxu0 0
      %1925 = vmatmul.mubr.bf16.gmra.mrb[0].mxu0 %v1601
      %v1926 = vpop.f32.mrb[0].mxu0
      %v1927 = vadd.f32 0.0, %v1926
      %v1928 = vpop.f32.mrb[0].mxu0
      %v1929 = vpop.f32.mrb[0].mxu0
      %v1930 = vadd.f32 0.0, %v1929
      %v1931 = vpop.f32.mrb[0].mxu0
      %1932 = vdwg.mxu0
      %v1933 = vadd.f32 %v1641, %v1807
      %v1934 = vadd.f32 %v1644, %v1810
      %v1935 = vadd.f32 %v1649, %v1815
      %v1936 = vadd.f32 %v1652, %v1818
      %v1937 = vadd.f32 %v1657, %v1823
      %v1938 = vadd.f32 %v1660, %v1826
      %v1939 = vadd.f32 %v1665, %v1831
      %v1940 = vadd.f32 %v1668, %v1834
      %v1941 = vadd.f32 %v1673, %v1839
      %v1942 = vadd.f32 %v1676, %v1842
      %v1943 = vadd.f32 %v1681, %v1847
      %v1944 = vadd.f32 %v1684, %v1850
      %v1945 = vadd.f32 %v1689, %v1855
      %v1946 = vadd.f32 %v1692, %v1858
      %v1947 = vadd.f32 %v1697, %v1863
      %v1948 = vadd.f32 %v1700, %v1866
      %v1949 = vadd.f32 %v1705, %v1871
      %v1950 = vadd.f32 %v1708, %v1874
      %v1951 = vadd.f32 %v1713, %v1879
      %v1952 = vadd.f32 %v1716, %v1882
      %v1953 = vadd.f32 %v1721, %v1887
      %v1954 = vadd.f32 %v1724, %v1890
      %v1955 = vadd.f32 %v1729, %v1895
      %v1956 = vadd.f32 %v1732, %v1898
      %v1957 = vadd.f32 %v1737, %v1903
      %v1958 = vadd.f32 %v1740, %v1906
      %v1959 = vadd.f32 %v1745, %v1911
      %v1960 = vadd.f32 %v1748, %v1914
      %v1961 = vadd.f32 %v1753, %v1919
      %v1962 = vadd.f32 %v1756, %v1922
      %v1963 = vadd.f32 %v1761, %v1927
      %v1964 = vadd.f32 %v1764, %v1930
      %v1965 = vsel %vm1386, %v1933, 0.0
      %v1966 = vsel %vm1386, %v1934, 0.0
      %v1967 = vadd.f32 %v1965, %v1966
      %v1968 = vsel %vm1386, %v1935, 0.0
      %v1969 = vadd.f32 %v1967, %v1968
      %v1970 = vsel %vm1386, %v1936, 0.0
      %v1971 = vadd.f32 %v1969, %v1970
      %v1972 = vsel %vm1386, %v1937, 0.0
      %v1973 = vadd.f32 %v1971, %v1972
      %v1974 = vsel %vm1386, %v1938, 0.0
      %v1975 = vadd.f32 %v1973, %v1974
      %v1976 = vsel %vm1386, %v1939, 0.0
      %v1977 = vadd.f32 %v1975, %v1976
      %v1978 = vsel %vm1386, %v1940, 0.0
      %v1979 = vadd.f32 %v1977, %v1978
      %v1980 = vsel %vm1386, %v1941, 0.0
      %v1981 = vadd.f32 %v1979, %v1980
      %v1982 = vsel %vm1386, %v1942, 0.0
      %v1983 = vadd.f32 %v1981, %v1982
      %v1984 = vsel %vm1386, %v1943, 0.0
      %v1985 = vadd.f32 %v1983, %v1984
      %v1986 = vsel %vm1386, %v1944, 0.0
      %v1987 = vadd.f32 %v1985, %v1986
      %v1988 = vsel %vm1386, %v1945, 0.0
      %v1989 = vadd.f32 %v1987, %v1988
      %v1990 = vsel %vm1386, %v1946, 0.0
      %v1991 = vadd.f32 %v1989, %v1990
      %v1992 = vsel %vm1386, %v1947, 0.0
      %v1993 = vadd.f32 %v1991, %v1992
      %v1994 = vsel %vm1386, %v1948, 0.0
      %v1995 = vadd.f32 %v1993, %v1994
      %v1996 = vsel %vm1386, %v1949, 0.0
      %v1997 = vadd.f32 %v1995, %v1996
      %v1998 = vsel %vm1386, %v1950, 0.0
      %v1999 = vadd.f32 %v1997, %v1998
      %v2000 = vsel %vm1386, %v1951, 0.0
      %v2001 = vadd.f32 %v1999, %v2000
      %v2002 = vsel %vm1386, %v1952, 0.0
      %v2003 = vadd.f32 %v2001, %v2002
      %v2004 = vsel %vm1386, %v1953, 0.0
      %v2005 = vadd.f32 %v2003, %v2004
      %v2006 = vsel %vm1386, %v1954, 0.0
      %v2007 = vadd.f32 %v2005, %v2006
      %v2008 = vsel %vm1386, %v1955, 0.0
      %v2009 = vadd.f32 %v2007, %v2008
      %v2010 = vsel %vm1386, %v1956, 0.0
      %v2011 = vadd.f32 %v2009, %v2010
      %v2012 = vsel %vm1386, %v1957, 0.0
      %v2013 = vadd.f32 %v2011, %v2012
      %v2014 = vsel %vm1386, %v1958, 0.0
      %v2015 = vadd.f32 %v2013, %v2014
      %v2016 = vsel %vm1386, %v1959, 0.0
      %v2017 = vadd.f32 %v2015, %v2016
      %v2018 = vsel %vm1386, %v1960, 0.0
      %v2019 = vadd.f32 %v2017, %v2018
      %v2020 = vsel %vm1386, %v1961, 0.0
      %v2021 = vadd.f32 %v2019, %v2020
      %v2022 = vsel %vm1386, %v1962, 0.0
      %v2023 = vadd.f32 %v2021, %v2022
      %v2024 = vsel %vm1386, %v1963, 0.0
      %v2025 = vadd.f32 %v2023, %v2024
      %v2026 = vsel %vm1386, %v1964, 0.0
      %v2027 = vadd.f32 %v2025, %v2026
      %v2028 = vrot.slane %v2027, 4
      %v2029 = vadd.f32 %v2027, %v2028
      %v2030 = vrot.slane %v2029, 2
      %v2031 = vadd.f32 %v2029, %v2030
      %v2032 = vrot.slane %v2031, 1
      %v2033 = vadd.f32 %v2031, %v2032
      %v2034 = vmul.f32 %v2033, 0.00390625
      %v2035 = vsub.f32 %v1933, %v2034
      %v2036 = vsub.f32 %v1934, %v2034
      %v2037 = vsub.f32 %v1935, %v2034
      %v2038 = vsub.f32 %v1936, %v2034
      %v2039 = vsub.f32 %v1937, %v2034
      %v2040 = vsub.f32 %v1938, %v2034
      %v2041 = vsub.f32 %v1939, %v2034
      %v2042 = vsub.f32 %v1940, %v2034
      %v2043 = vsub.f32 %v1941, %v2034
      %v2044 = vsub.f32 %v1942, %v2034
      %v2045 = vsub.f32 %v1943, %v2034
      %v2046 = vsub.f32 %v1944, %v2034
      %v2047 = vsub.f32 %v1945, %v2034
      %v2048 = vsub.f32 %v1946, %v2034
      %v2049 = vsub.f32 %v1947, %v2034
      %v2050 = vsub.f32 %v1948, %v2034
      %v2051 = vsub.f32 %v1949, %v2034
      %v2052 = vsub.f32 %v1950, %v2034
      %v2053 = vsub.f32 %v1951, %v2034
      %v2054 = vsub.f32 %v1952, %v2034
      %v2055 = vsub.f32 %v1953, %v2034
      %v2056 = vsub.f32 %v1954, %v2034
      %v2057 = vsub.f32 %v1955, %v2034
      %v2058 = vsub.f32 %v1956, %v2034
      %v2059 = vsub.f32 %v1957, %v2034
      %v2060 = vsub.f32 %v1958, %v2034
      %v2061 = vsub.f32 %v1959, %v2034
      %v2062 = vsub.f32 %v1960, %v2034
      %v2063 = vsub.f32 %v1961, %v2034
      %v2064 = vsub.f32 %v1962, %v2034
      %v2065 = vsub.f32 %v1963, %v2034
      %v2066 = vsub.f32 %v1964, %v2034
      %v2067 = vmul.f32 %v2035, %v2035
      %v2068 = vmul.f32 %v2036, %v2036
      %v2069 = vmul.f32 %v2037, %v2037
      %v2070 = vmul.f32 %v2038, %v2038
      %v2071 = vmul.f32 %v2039, %v2039
      %v2072 = vmul.f32 %v2040, %v2040
      %v2073 = vmul.f32 %v2041, %v2041
      %v2074 = vmul.f32 %v2042, %v2042
      %v2075 = vmul.f32 %v2043, %v2043
      %v2076 = vmul.f32 %v2044, %v2044
      %v2077 = vmul.f32 %v2045, %v2045
      %v2078 = vmul.f32 %v2046, %v2046
      %v2079 = vmul.f32 %v2047, %v2047
      %v2080 = vmul.f32 %v2048, %v2048
      %v2081 = vmul.f32 %v2049, %v2049
      %v2082 = vmul.f32 %v2050, %v2050
      %v2083 = vmul.f32 %v2051, %v2051
      %v2084 = vmul.f32 %v2052, %v2052
      %v2085 = vmul.f32 %v2053, %v2053
      %v2086 = vmul.f32 %v2054, %v2054
      %v2087 = vmul.f32 %v2055, %v2055
      %v2088 = vmul.f32 %v2056, %v2056
      %v2089 = vmul.f32 %v2057, %v2057
      %v2090 = vmul.f32 %v2058, %v2058
      %v2091 = vmul.f32 %v2059, %v2059
      %v2092 = vmul.f32 %v2060, %v2060
      %v2093 = vmul.f32 %v2061, %v2061
      %v2094 = vmul.f32 %v2062, %v2062
      %v2095 = vmul.f32 %v2063, %v2063
      %v2096 = vmul.f32 %v2064, %v2064
      %v2097 = vmul.f32 %v2065, %v2065
      %v2098 = vmul.f32 %v2066, %v2066
      %v2099 = vsel %vm1386, %v2067, 0.0
      %v2100 = vsel %vm1386, %v2068, 0.0
      %v2101 = vadd.f32 %v2099, %v2100
      %v2102 = vsel %vm1386, %v2069, 0.0
      %v2103 = vadd.f32 %v2101, %v2102
      %v2104 = vsel %vm1386, %v2070, 0.0
      %v2105 = vadd.f32 %v2103, %v2104
      %v2106 = vsel %vm1386, %v2071, 0.0
      %v2107 = vadd.f32 %v2105, %v2106
      %v2108 = vsel %vm1386, %v2072, 0.0
      %v2109 = vadd.f32 %v2107, %v2108
      %v2110 = vsel %vm1386, %v2073, 0.0
      %v2111 = vadd.f32 %v2109, %v2110
      %v2112 = vsel %vm1386, %v2074, 0.0
      %v2113 = vadd.f32 %v2111, %v2112
      %v2114 = vsel %vm1386, %v2075, 0.0
      %v2115 = vadd.f32 %v2113, %v2114
      %v2116 = vsel %vm1386, %v2076, 0.0
      %v2117 = vadd.f32 %v2115, %v2116
      %v2118 = vsel %vm1386, %v2077, 0.0
      %v2119 = vadd.f32 %v2117, %v2118
      %v2120 = vsel %vm1386, %v2078, 0.0
      %v2121 = vadd.f32 %v2119, %v2120
      %v2122 = vsel %vm1386, %v2079, 0.0
      %v2123 = vadd.f32 %v2121, %v2122
      %v2124 = vsel %vm1386, %v2080, 0.0
      %v2125 = vadd.f32 %v2123, %v2124
      %v2126 = vsel %vm1386, %v2081, 0.0
      %v2127 = vadd.f32 %v2125, %v2126
      %v2128 = vsel %vm1386, %v2082, 0.0
      %v2129 = vadd.f32 %v2127, %v2128
      %v2130 = vsel %vm1386, %v2083, 0.0
      %v2131 = vadd.f32 %v2129, %v2130
      %v2132 = vsel %vm1386, %v2084, 0.0
      %v2133 = vadd.f32 %v2131, %v2132
      %v2134 = vsel %vm1386, %v2085, 0.0
      %v2135 = vadd.f32 %v2133, %v2134
      %v2136 = vsel %vm1386, %v2086, 0.0
      %v2137 = vadd.f32 %v2135, %v2136
      %v2138 = vsel %vm1386, %v2087, 0.0
      %v2139 = vadd.f32 %v2137, %v2138
      %v2140 = vsel %vm1386, %v2088, 0.0
      %v2141 = vadd.f32 %v2139, %v2140
      %v2142 = vsel %vm1386, %v2089, 0.0
      %v2143 = vadd.f32 %v2141, %v2142
      %v2144 = vsel %vm1386, %v2090, 0.0
      %v2145 = vadd.f32 %v2143, %v2144
      %v2146 = vsel %vm1386, %v2091, 0.0
      %v2147 = vadd.f32 %v2145, %v2146
      %v2148 = vsel %vm1386, %v2092, 0.0
      %v2149 = vadd.f32 %v2147, %v2148
      %v2150 = vsel %vm1386, %v2093, 0.0
      %v2151 = vadd.f32 %v2149, %v2150
      %v2152 = vsel %vm1386, %v2094, 0.0
      %v2153 = vadd.f32 %v2151, %v2152
      %v2154 = vsel %vm1386, %v2095, 0.0
      %v2155 = vadd.f32 %v2153, %v2154
      %v2156 = vsel %vm1386, %v2096, 0.0
      %v2157 = vadd.f32 %v2155, %v2156
      %v2158 = vsel %vm1386, %v2097, 0.0
      %v2159 = vadd.f32 %v2157, %v2158
      %v2160 = vsel %vm1386, %v2098, 0.0
      %v2161 = vadd.f32 %v2159, %v2160
      %v2162 = vrot.slane %v2161, 4
      %v2163 = vadd.f32 %v2161, %v2162
      %v2164 = vrot.slane %v2163, 2
      %v2165 = vadd.f32 %v2163, %v2164
      %v2166 = vrot.slane %v2165, 1
      %v2167 = vadd.f32 %v2165, %v2166
      %vm2168 = vcmask 1040384
      %v2169 = vsel %vm2168, %v2034, %v2167
      %vm2170 = vcmask 58368
      %2171 = vst.msk [vmem:[%s208] sm:$0x3] %vm2170, %v2169
      %2172 = vxpose.xlu0.b32.start [1/16] %v1933, 128
      %2173 = vxpose.xlu0.b32.cont [2/16] %v1934, 128
      %2174 = vxpose.xlu0.b32.cont [3/16] %v1935, 128
      %2175 = vxpose.xlu0.b32.cont [4/16] %v1936, 128
      %2176 = vxpose.xlu0.b32.cont [5/16] %v1937, 128
      %2177 = vxpose.xlu0.b32.cont [6/16] %v1938, 128
      %2178 = vxpose.xlu0.b32.cont [7/16] %v1939, 128
      %2179 = vxpose.xlu0.b32.cont [8/16] %v1940, 128
      %2180 = vxpose.xlu0.b32.cont [9/16] %v1941, 128
      %2181 = vxpose.xlu0.b32.cont [10/16] %v1942, 128
      %2182 = vxpose.xlu0.b32.cont [11/16] %v1943, 128
      %2183 = vxpose.xlu0.b32.cont [12/16] %v1944, 128
      %2184 = vxpose.xlu0.b32.cont [13/16] %v1945, 128
      %2185 = vxpose.xlu0.b32.cont [14/16] %v1946, 128
      %2186 = vxpose.xlu0.b32.cont [15/16] %v1947, 128
      %2187 = vxpose.xlu0.b32.end [16/16] %v1948, 128
      %v2188 = vpop.trf.xlu0
      %v2189 = vpop.trf.xlu0
      %v2190 = vpop.trf.xlu0
      %v2191 = vpop.trf.xlu0
      %v2192 = vpop.trf.xlu0
      %v2193 = vpop.trf.xlu0
      %v2194 = vpop.trf.xlu0
      %v2195 = vpop.trf.xlu0
      %v2196 = vpop.trf.xlu0
      %v2197 = vpop.trf.xlu0
      %v2198 = vpop.trf.xlu0
      %v2199 = vpop.trf.xlu0
      %v2200 = vpop.trf.xlu0
      %v2201 = vpop.trf.xlu0
      %v2202 = vpop.trf.xlu0
      %v2203 = vpop.trf.xlu0
      %2204 = vxpose.xlu0.b32.start [1/16] %v1949, 128
      %2205 = vxpose.xlu0.b32.cont [2/16] %v1950, 128
      %2206 = vxpose.xlu0.b32.cont [3/16] %v1951, 128
      %2207 = vxpose.xlu0.b32.cont [4/16] %v1952, 128
      %2208 = vxpose.xlu0.b32.cont [5/16] %v1953, 128
      %2209 = vxpose.xlu0.b32.cont [6/16] %v1954, 128
      %2210 = vxpose.xlu0.b32.cont [7/16] %v1955, 128
      %2211 = vxpose.xlu0.b32.cont [8/16] %v1956, 128
      %2212 = vxpose.xlu0.b32.cont [9/16] %v1957, 128
      %2213 = vxpose.xlu0.b32.cont [10/16] %v1958, 128
      %2214 = vxpose.xlu0.b32.cont [11/16] %v1959, 128
      %2215 = vxpose.xlu0.b32.cont [12/16] %v1960, 128
      %2216 = vxpose.xlu0.b32.cont [13/16] %v1961, 128
      %2217 = vxpose.xlu0.b32.cont [14/16] %v1962, 128
      %2218 = vxpose.xlu0.b32.cont [15/16] %v1963, 128
      %2219 = vxpose.xlu0.b32.end [16/16] %v1964, 128
      %v2220 = vpop.trf.xlu0
      %v2221 = vpop.trf.xlu0
      %v2222 = vpop.trf.xlu0
      %v2223 = vpop.trf.xlu0
      %v2224 = vpop.trf.xlu0
      %v2225 = vpop.trf.xlu0
      %v2226 = vpop.trf.xlu0
      %v2227 = vpop.trf.xlu0
      %v2228 = vpop.trf.xlu0
      %v2229 = vpop.trf.xlu0
      %v2230 = vpop.trf.xlu0
      %v2231 = vpop.trf.xlu0
      %v2232 = vpop.trf.xlu0
      %v2233 = vpop.trf.xlu0
      %v2234 = vpop.trf.xlu0
      %v2235 = vpop.trf.xlu0
      %2236 = vst [vmem:[%s204] sm:$0xff] %v2188
      %2237 = vst [vmem:[%s204 + $0x8] sm:$0xff] %v2220
      %p2238 = scmp.lt.s32.totalorder %s16, 1
      %s2239 = scalar_select %p2238, %s16, 1
      %s2240 = smul.addr %s2239, 2
      %s2241 = smul.addr %s2240, 8
      %s2242 = scalar_lea.vmem %s3, %s2241
      %p2243 = scmp.lt.s32.totalorder %s16, 1
      %s2244 = scalar_select %p2243, %s16, 1
      %s2245 = smul.addr %s2244, 2
      %s2246 = scalar_lea.vmem %s4, %s2245
      // Predicated region
      $region33: #{conv313.2} parent=31 // pred_check
        %p2247 = pneg %p102
      $region34: #{conv313.2} parent=31 // pred_check_branch
        %2249 = sbr.rel (%p2247) target = $region36
      $region35: #{conv313.2} parent=31 // pred_region
        _
      $region36: #{conv313.2} parent=31 // pred_fallthru
        _
      // Predicated region
      $region37: #{conv313.2} parent=31 // pred_check
        %p2250 = pneg %p128
      $region38: #{conv313.2} parent=31 // pred_check_branch
        %2252 = sbr.rel (%p2250) target = $region40
      $region39: #{conv313.2} parent=31 // pred_region
        _
      $region40: #{conv313.2} parent=31 // pred_fallthru
        _
    $region32: #{conv313.2} parent=5 // pred_fallthru
      _
    %p2253 = scmp.le.s32.totalorder 2, %s11
    // Predicated region
    $region41: #{conv313.2} parent=5 // pred_check
      %p2254 = pneg %p2253
    $region42: #{conv313.2} parent=5 // pred_check_branch
      %2256 = sbr.rel (%p2254) target = $region44
    $region43: #{conv313.2} parent=5 // pred_region
      %s2257 = ssub.s32 %s11, 2
      // Predicated region
      $region45: #{conv313.2} parent=43 // pred_check
        %p2258 = pneg %p108
      $region46: #{conv313.2} parent=43 // pred_check_branch
        %2260 = sbr.rel (%p2258) target = $region48
      $region47: #{conv313.2} parent=43 // pred_region
        %p2261 = scmp.lt.s32.totalorder %s17, 1
        %s2262 = scalar_select %p2261, %s17, 1
        %s2263 = smul.addr %s2262, 2
        %s2264 = smul.addr %s2263, 8
        %s2265 = scalar_lea.vmem %s3, %s2264
      $region48: #{conv313.2} parent=43 // pred_fallthru
        _
      // Predicated region
      $region49: #{conv313.2} parent=43 // pred_check
        %p2266 = pneg %p134
      $region50: #{conv313.2} parent=43 // pred_check_branch
        %2268 = sbr.rel (%p2266) target = $region52
      $region51: #{conv313.2} parent=43 // pred_region
        %p2269 = scmp.lt.s32.totalorder %s17, 1
        %s2270 = scalar_select %p2269, %s17, 1
        %s2271 = smul.addr %s2270, 2
        %s2272 = scalar_lea.vmem %s4, %s2271
      $region52: #{conv313.2} parent=43 // pred_fallthru
        _
    $region44: #{conv313.2} parent=5 // pred_fallthru
      _
  $region6: #{conv313.2} parent=0 // loop_footer
    %s15 = sadd.s32 1, %s11
  $region7: #{conv313.2} parent=0 // loop_footer_branch
    %10 = sbr.rel target = $region3
  $region8: #{conv313.2} parent=0 // loop_exit
    _

</llo_original>
